<compile_context>
chip_gen: v6e
topology: v6e:2x2x1
jax: 0.10.0
libtpu: 0.0.40
codegen_flags: <defaults>
</compile_context>

<pallas_src>
import functools

import jax
import jax.numpy as jnp
from jax import lax
from jax.experimental import pallas as pl
from jax.experimental.pallas import tpu as pltpu

LANE = 128


def _silu(v):
    # x * sigmoid(x); exp goes to the EUP slot.
    return v * (1.0 / (1.0 + jnp.exp(-v)))


def _round_up(n, m):
    return ((n + m - 1) // m) * m


def _dwconv_kernel(x_ref, wd_ref, b1_ref, wp_ref, b2_ref, o_ref,
                   pad_ref, acc_ref, *, ksize):
    # x_ref : (1, H, W, Cp)   f32      input block (one image)
    # wd_ref: (K*K, Cp)       f32      depthwise weights, BN1 scale folded in
    # b1_ref: (1, Cp)         f32      folded BN1 bias
    # wp_ref: (Cp, Coutp)     bf16     pointwise weights, BN2 scale folded in
    # b2_ref: (1, Coutp)      f32      folded BN2 bias
    # o_ref : (1, H, W, Coutp)
    # pad_ref: (H+2p, W+2p, Cp) f32 scratch (zero halo + interior)
    # acc_ref: (H, W, Cp)       f32 scratch (depthwise accumulator)
    _, H, W, Cp = x_ref.shape
    Coutp = wp_ref.shape[1]
    p = (ksize - 1) // 2
    Hp = H + 2 * p
    Wp = W + 2 * p

    # ---- refresh only the halo border (interior fully overwritten below).
    if p > 0:
        pad_ref[0:p, :, :] = jnp.zeros((p, Wp, Cp), jnp.float32)
        pad_ref[Hp - p:Hp, :, :] = jnp.zeros((p, Wp, Cp), jnp.float32)
        pad_ref[p:Hp - p, 0:p, :] = jnp.zeros((H, p, Cp), jnp.float32)
        pad_ref[p:Hp - p, Wp - p:Wp, :] = jnp.zeros((H, p, Cp), jnp.float32)

    pad_ref[p:p + H, p:p + W, :] = x_ref[0].astype(jnp.float32)

    # ---- depthwise KxK conv (per-channel, VPU), accumulated in VMEM scratch.
    for dh in range(ksize):
        band = pad_ref[dh:dh + H, 0:W, :] * wd_ref[dh * ksize + 0]
        for dw in range(1, ksize):
            band = band + pad_ref[dh:dh + H, dw:dw + W, :] * wd_ref[dh * ksize + dw]
        if dh == 0:
            acc_ref[...] = band
        else:
            acc_ref[...] += band

    y1 = acc_ref[...] + b1_ref[...]          # BN1 bias (scale already folded)
    y1 = _silu(y1)
    y1m = y1.astype(jnp.bfloat16).reshape(H * W, Cp)   # lane-dense matmul LHS

    # ---- pointwise 1x1 conv: single MXU matmul, bf16 in / f32 accumulate.
    y2 = jnp.dot(y1m, wp_ref[...], preferred_element_type=jnp.float32)
    y2 = y2 + b2_ref[...]                    # BN2 bias (scale already folded)
    y2 = _silu(y2)
    o_ref[0] = y2.reshape(H, W, Coutp).astype(o_ref.dtype)


def dwconv_pallas(x_nhwc, wd, b1, wp, b2, *, ksize):
    B, H, W, Cp = x_nhwc.shape
    Coutp = wp.shape[1]
    p = (ksize - 1) // 2
    kernel = functools.partial(_dwconv_kernel, ksize=ksize)
    return pl.pallas_call(
        kernel,
        out_shape=jax.ShapeDtypeStruct((B, H, W, Coutp), x_nhwc.dtype),
        grid_spec=pltpu.PrefetchScalarGridSpec(
            num_scalar_prefetch=0,
            grid=(B,),
            in_specs=[
                pl.BlockSpec((1, H, W, Cp), lambda b: (b, 0, 0, 0)),
                pl.BlockSpec((ksize * ksize, Cp), lambda b: (0, 0)),
                pl.BlockSpec((1, Cp), lambda b: (0, 0)),
                pl.BlockSpec((Cp, Coutp), lambda b: (0, 0)),
                pl.BlockSpec((1, Coutp), lambda b: (0, 0)),
            ],
            out_specs=pl.BlockSpec((1, H, W, Coutp), lambda b: (b, 0, 0, 0)),
            scratch_shapes=[
                pltpu.VMEM((H + 2 * p, W + 2 * p, Cp), jnp.float32),
                pltpu.VMEM((H, W, Cp), jnp.float32),
            ],
        ),
        compiler_params=pltpu.CompilerParams(
            dimension_semantics=("parallel",)),
    )(x_nhwc, wd, b1, wp, b2)


def dwconv_t(x_nchw, wd_f, b1, wp_f, b2, *, ksize):
    """NCHW wrapper: pads channels to lane width, folds params, calls the kernel."""
    assert ksize % 2 == 1, "only odd ksize (SAME padding) supported"
    B, C, H, W = x_nchw.shape
    Cout = wp_f.shape[1]
    Cp = max(LANE, _round_up(C, LANE))
    Coutp = max(LANE, _round_up(Cout, LANE))

    x = jnp.transpose(x_nchw, (0, 2, 3, 1))                        # NHWC
    x = jnp.pad(x, ((0, 0), (0, 0), (0, 0), (0, Cp - C)))

    wd_k = jnp.pad(wd_f.reshape(ksize * ksize, C), ((0, 0), (0, Cp - C)))
    b1_k = jnp.pad(b1, (0, Cp - C)).reshape(1, Cp)
    wp_k = jnp.pad(wp_f, ((0, Cp - C), (0, Coutp - Cout))).astype(jnp.bfloat16)
    b2_k = jnp.pad(b2, (0, Coutp - Cout)).reshape(1, Coutp)

    out = dwconv_pallas(x, wd_k, b1_k, wp_k, b2_k, ksize=ksize)     # (B,H,W,Coutp)
    out = out[..., :Cout]
    return jnp.transpose(out, (0, 3, 1, 2))                         # NCHW


def dwconv_ref_nhwc(x, wd_f, b1, wp_bf16, b2, ksize):
    """Pure-JAX reference (NHWC), same folded params / same bf16 quantization."""
    C = x.shape[-1]
    dn = ("NHWC", "HWIO", "NHWC")
    y = lax.conv_general_dilated(
        x, wd_f.reshape(ksize, ksize, 1, C), (1, 1), "SAME",
        dimension_numbers=dn, feature_group_count=C)
    y = _silu(y + b1)
    y = y.astype(jnp.bfloat16)
    z = jnp.einsum("nhwc,cd->nhwd", y, wp_bf16,
                   preferred_element_type=jnp.float32)
    z = _silu(z + b2)
    return z


def make_params(key, c_in, c_out, ksize):
    """Deterministic synthetic params with BN (eval mode) scale folded into weights."""
    ks = jax.random.split(key, 10)
    eps = 1e-5

    wd = 0.1 * jax.random.normal(ks[0], (ksize, ksize, c_in), jnp.float32)  # depthwise
    wp = 0.1 * jax.random.normal(ks[1], (c_in, c_out), jnp.float32)         # pointwise

    g1 = jax.random.uniform(ks[2], (c_in,), jnp.float32, 0.5, 1.5)
    be1 = 0.1 * jax.random.normal(ks[3], (c_in,), jnp.float32)
    m1 = 0.1 * jax.random.normal(ks[4], (c_in,), jnp.float32)
    v1 = jax.random.uniform(ks[5], (c_in,), jnp.float32, 0.5, 1.5)

    g2 = jax.random.uniform(ks[6], (c_out,), jnp.float32, 0.5, 1.5)
    be2 = 0.1 * jax.random.normal(ks[7], (c_out,), jnp.float32)
    m2 = 0.1 * jax.random.normal(ks[8], (c_out,), jnp.float32)
    v2 = jax.random.uniform(ks[9], (c_out,), jnp.float32, 0.5, 1.5)

    s1 = g1 / jnp.sqrt(v1 + eps)
    b1 = be1 - m1 * s1
    s2 = g2 / jnp.sqrt(v2 + eps)
    b2 = be2 - m2 * s2

    # Fold BN scales into the conv weights (bias adds stay in-kernel).
    wd_f = wd * s1          # (K, K, C)  * (C,)
    wp_f = wp * s2          # (C, Cout)  * (Cout,)
    return wd_f, b1, wp_f, b2


if __name__ == "__main__":
    B, C_IN, C_OUT, H, W, KSIZE = 2, 8, 16, 16, 16, 3
    key = jax.random.PRNGKey(0)
    kx, kp = jax.random.split(key)

    x_nchw = jax.random.normal(kx, (B, C_IN, H, W), jnp.float32)
    wd_f, b1, wp_f, b2 = make_params(kp, C_IN, C_OUT, KSIZE)

    out_nchw = dwconv_t(x_nchw, wd_f, b1, wp_f, b2, ksize=KSIZE)
    jax.block_until_ready(out_nchw)

    # Reference check (same folded params, same bf16 quantization of the matmul).
    x_nhwc = jnp.transpose(x_nchw, (0, 2, 3, 1))
    ref_nhwc = dwconv_ref_nhwc(x_nhwc, wd_f, b1,
                               wp_f.astype(jnp.bfloat16), b2, KSIZE)
    ref_nchw = jnp.transpose(ref_nhwc, (0, 3, 1, 2))

    assert out_nchw.shape == (B, C_OUT, H, W)
    max_err = float(jnp.max(jnp.abs(out_nchw - ref_nchw)))
    assert jnp.allclose(out_nchw, ref_nchw, atol=1e-3, rtol=1e-3), max_err

    print("KERNEL_OK")
</pallas_src>

<mosaic_0001>
module attributes {stable_mosaic.version = 11 : i64} {
  func.func @_dwconv_kernel(%arg0: i32, %arg1: memref<1x16x16x128xf32, #tpu.memory_space<vmem>>, %arg2: memref<9x128xf32, #tpu.memory_space<vmem>>, %arg3: memref<1x128xf32, #tpu.memory_space<vmem>>, %arg4: memref<128x128xbf16, #tpu.memory_space<vmem>>, %arg5: memref<1x128xf32, #tpu.memory_space<vmem>>, %arg6: memref<1x16x16x128xf32, #tpu.memory_space<vmem>>, %arg7: memref<18x18x128xf32, #tpu.memory_space<vmem>>, %arg8: memref<16x16x128xf32, #tpu.memory_space<vmem>>) attributes {dimension_semantics = [#tpu.dimension_semantics<parallel>], iteration_bounds = array<i64: 2>, scalar_prefetch = 0 : i64, scratch_operands = 2 : i64, tpu.core_type = #tpu.core_type<tc>, window_params = [{transform_indices = @transform_0, window_bounds = array<i64: 1, 16, 16, 128>}, {pipeline_mode = #tpu.pipeline_mode<synchronous>, transform_indices = @transform_1, window_bounds = array<i64: 9, 128>}, {pipeline_mode = #tpu.pipeline_mode<synchronous>, transform_indices = @transform_2, window_bounds = array<i64: 1, 128>}, {pipeline_mode = #tpu.pipeline_mode<synchronous>, transform_indices = @transform_3, window_bounds = array<i64: 128, 128>}, {pipeline_mode = #tpu.pipeline_mode<synchronous>, transform_indices = @transform_4, window_bounds = array<i64: 1, 128>}, {transform_indices = @transform_5, window_bounds = array<i64: 1, 16, 16, 128>}]} {
    %cst = arith.constant 0.000000e+00 : f32
    %0 = vector.broadcast %cst : f32 to vector<1x18x128xf32>
    %c0 = arith.constant 0 : index
    %c0_0 = arith.constant 0 : index
    %c0_1 = arith.constant 0 : index
    %1 = vector.load %arg7[%c0, %c0_0, %c0_1] : memref<18x18x128xf32, #tpu.memory_space<vmem>>, vector<1x18x128xf32>
    tpu.vector_store %arg7[%c0, %c0_0, %c0_1], %0 {strides = array<i32>} : memref<18x18x128xf32, #tpu.memory_space<vmem>>, vector<1x18x128xf32>,
    %cst_2 = arith.constant 0.000000e+00 : f32
    %2 = vector.broadcast %cst_2 : f32 to vector<1x18x128xf32>
    %c17 = arith.constant 17 : index
    %c0_3 = arith.constant 0 : index
    %c0_4 = arith.constant 0 : index
    %3 = vector.load %arg7[%c17, %c0_3, %c0_4] : memref<18x18x128xf32, #tpu.memory_space<vmem>>, vector<1x18x128xf32>
    tpu.vector_store %arg7[%c17, %c0_3, %c0_4], %2 {strides = array<i32>} : memref<18x18x128xf32, #tpu.memory_space<vmem>>, vector<1x18x128xf32>,
    %cst_5 = arith.constant 0.000000e+00 : f32
    %4 = vector.broadcast %cst_5 : f32 to vector<16x1x128xf32>
    %c1 = arith.constant 1 : index
    %c0_6 = arith.constant 0 : index
    %c0_7 = arith.constant 0 : index
    %5 = vector.load %arg7[%c1, %c0_6, %c0_7] : memref<18x18x128xf32, #tpu.memory_space<vmem>>, vector<16x1x128xf32>
    tpu.vector_store %arg7[%c1, %c0_6, %c0_7], %4 {strides = array<i32>} : memref<18x18x128xf32, #tpu.memory_space<vmem>>, vector<16x1x128xf32>,
    %cst_8 = arith.constant 0.000000e+00 : f32
    %6 = vector.broadcast %cst_8 : f32 to vector<16x1x128xf32>
    %c1_9 = arith.constant 1 : index
    %c17_10 = arith.constant 17 : index
    %c0_11 = arith.constant 0 : index
    %7 = vector.load %arg7[%c1_9, %c17_10, %c0_11] : memref<18x18x128xf32, #tpu.memory_space<vmem>>, vector<16x1x128xf32>
    tpu.vector_store %arg7[%c1_9, %c17_10, %c0_11], %6 {strides = array<i32>} : memref<18x18x128xf32, #tpu.memory_space<vmem>>, vector<16x1x128xf32>,
    %c0_12 = arith.constant 0 : index
    %c0_13 = arith.constant 0 : index
    %c0_14 = arith.constant 0 : index
    %c0_15 = arith.constant 0 : index
    %8 = vector.load %arg1[%c0_12, %c0_13, %c0_14, %c0_15] : memref<1x16x16x128xf32, #tpu.memory_space<vmem>>, vector<1x16x16x128xf32>
    %9 = vector.shape_cast %8 : vector<1x16x16x128xf32> to vector<16x16x128xf32>
    %c1_16 = arith.constant 1 : index
    %c1_17 = arith.constant 1 : index
    %c0_18 = arith.constant 0 : index
    %10 = vector.load %arg7[%c1_16, %c1_17, %c0_18] : memref<18x18x128xf32, #tpu.memory_space<vmem>>, vector<16x16x128xf32>
    tpu.vector_store %arg7[%c1_16, %c1_17, %c0_18], %9 {strides = array<i32>} : memref<18x18x128xf32, #tpu.memory_space<vmem>>, vector<16x16x128xf32>,
    %c0_19 = arith.constant 0 : index
    %c0_20 = arith.constant 0 : index
    %c0_21 = arith.constant 0 : index
    %11 = vector.load %arg7[%c0_19, %c0_20, %c0_21] : memref<18x18x128xf32, #tpu.memory_space<vmem>>, vector<16x16x128xf32>
    %c0_22 = arith.constant 0 : index
    %c0_23 = arith.constant 0 : index
    %12 = vector.load %arg2[%c0_22, %c0_23] : memref<9x128xf32, #tpu.memory_space<vmem>>, vector<1x128xf32>
    %13 = vector.shape_cast %12 : vector<1x128xf32> to vector<128xf32>
    %14 = vector.shape_cast %13 : vector<128xf32> to vector<1x1x128xf32>
    %15 = vector.broadcast %14 : vector<1x1x128xf32> to vector<16x16x128xf32>
    %16 = arith.mulf %11, %15 : vector<16x16x128xf32>
    %c0_24 = arith.constant 0 : index
    %c1_25 = arith.constant 1 : index
    %c0_26 = arith.constant 0 : index
    %17 = vector.load %arg7[%c0_24, %c1_25, %c0_26] : memref<18x18x128xf32, #tpu.memory_space<vmem>>, vector<16x16x128xf32>
    %c1_27 = arith.constant 1 : index
    %c0_28 = arith.constant 0 : index
    %18 = vector.load %arg2[%c1_27, %c0_28] : memref<9x128xf32, #tpu.memory_space<vmem>>, vector<1x128xf32>
    %19 = vector.shape_cast %18 : vector<1x128xf32> to vector<128xf32>
    %20 = vector.shape_cast %19 : vector<128xf32> to vector<1x1x128xf32>
    %21 = vector.broadcast %20 : vector<1x1x128xf32> to vector<16x16x128xf32>
    %22 = arith.mulf %17, %21 : vector<16x16x128xf32>
    %23 = arith.addf %16, %22 : vector<16x16x128xf32>
    %c0_29 = arith.constant 0 : index
    %c2 = arith.constant 2 : index
    %c0_30 = arith.constant 0 : index
    %24 = vector.load %arg7[%c0_29, %c2, %c0_30] : memref<18x18x128xf32, #tpu.memory_space<vmem>>, vector<16x16x128xf32>
    %c2_31 = arith.constant 2 : index
    %c0_32 = arith.constant 0 : index
    %25 = vector.load %arg2[%c2_31, %c0_32] : memref<9x128xf32, #tpu.memory_space<vmem>>, vector<1x128xf32>
    %26 = vector.shape_cast %25 : vector<1x128xf32> to vector<128xf32>
    %27 = vector.shape_cast %26 : vector<128xf32> to vector<1x1x128xf32>
    %28 = vector.broadcast %27 : vector<1x1x128xf32> to vector<16x16x128xf32>
    %29 = arith.mulf %24, %28 : vector<16x16x128xf32>
    %30 = arith.addf %23, %29 : vector<16x16x128xf32>
    %c0_33 = arith.constant 0 : index
    %c0_34 = arith.constant 0 : index
    %c0_35 = arith.constant 0 : index
    %31 = vector.load %arg8[%c0_33, %c0_34, %c0_35] : memref<16x16x128xf32, #tpu.memory_space<vmem>>, vector<16x16x128xf32>
    tpu.vector_store %arg8[%c0_33, %c0_34, %c0_35], %30 {strides = array<i32>} : memref<16x16x128xf32, #tpu.memory_space<vmem>>, vector<16x16x128xf32>,
    %c1_36 = arith.constant 1 : index
    %c0_37 = arith.constant 0 : index
    %c0_38 = arith.constant 0 : index
    %32 = vector.load %arg7[%c1_36, %c0_37, %c0_38] : memref<18x18x128xf32, #tpu.memory_space<vmem>>, vector<16x16x128xf32>
    %c3 = arith.constant 3 : index
    %c0_39 = arith.constant 0 : index
    %33 = vector.load %arg2[%c3, %c0_39] : memref<9x128xf32, #tpu.memory_space<vmem>>, vector<1x128xf32>
    %34 = vector.shape_cast %33 : vector<1x128xf32> to vector<128xf32>
    %35 = vector.shape_cast %34 : vector<128xf32> to vector<1x1x128xf32>
    %36 = vector.broadcast %35 : vector<1x1x128xf32> to vector<16x16x128xf32>
    %37 = arith.mulf %32, %36 : vector<16x16x128xf32>
    %c1_40 = arith.constant 1 : index
    %c1_41 = arith.constant 1 : index
    %c0_42 = arith.constant 0 : index
    %38 = vector.load %arg7[%c1_40, %c1_41, %c0_42] : memref<18x18x128xf32, #tpu.memory_space<vmem>>, vector<16x16x128xf32>
    %c4 = arith.constant 4 : index
    %c0_43 = arith.constant 0 : index
    %39 = vector.load %arg2[%c4, %c0_43] : memref<9x128xf32, #tpu.memory_space<vmem>>, vector<1x128xf32>
    %40 = vector.shape_cast %39 : vector<1x128xf32> to vector<128xf32>
    %41 = vector.shape_cast %40 : vector<128xf32> to vector<1x1x128xf32>
    %42 = vector.broadcast %41 : vector<1x1x128xf32> to vector<16x16x128xf32>
    %43 = arith.mulf %38, %42 : vector<16x16x128xf32>
    %44 = arith.addf %37, %43 : vector<16x16x128xf32>
    %c1_44 = arith.constant 1 : index
    %c2_45 = arith.constant 2 : index
    %c0_46 = arith.constant 0 : index
    %45 = vector.load %arg7[%c1_44, %c2_45, %c0_46] : memref<18x18x128xf32, #tpu.memory_space<vmem>>, vector<16x16x128xf32>
    %c5 = arith.constant 5 : index
    %c0_47 = arith.constant 0 : index
    %46 = vector.load %arg2[%c5, %c0_47] : memref<9x128xf32, #tpu.memory_space<vmem>>, vector<1x128xf32>
    %47 = vector.shape_cast %46 : vector<1x128xf32> to vector<128xf32>
    %48 = vector.shape_cast %47 : vector<128xf32> to vector<1x1x128xf32>
    %49 = vector.broadcast %48 : vector<1x1x128xf32> to vector<16x16x128xf32>
    %50 = arith.mulf %45, %49 : vector<16x16x128xf32>
    %51 = arith.addf %44, %50 : vector<16x16x128xf32>
    %c0_48 = arith.constant 0 : index
    %c0_49 = arith.constant 0 : index
    %c0_50 = arith.constant 0 : index
    %52 = vector.load %arg8[%c0_48, %c0_49, %c0_50] : memref<16x16x128xf32, #tpu.memory_space<vmem>>, vector<16x16x128xf32>
    %53 = arith.addf %52, %51 : vector<16x16x128xf32>
    %c0_51 = arith.constant 0 : index
    %c0_52 = arith.constant 0 : index
    %c0_53 = arith.constant 0 : index
    %54 = vector.load %arg8[%c0_51, %c0_52, %c0_53] : memref<16x16x128xf32, #tpu.memory_space<vmem>>, vector<16x16x128xf32>
    tpu.vector_store %arg8[%c0_51, %c0_52, %c0_53], %53 {strides = array<i32>} : memref<16x16x128xf32, #tpu.memory_space<vmem>>, vector<16x16x128xf32>,
    %c2_54 = arith.constant 2 : index
    %c0_55 = arith.constant 0 : index
    %c0_56 = arith.constant 0 : index
    %55 = vector.load %arg7[%c2_54, %c0_55, %c0_56] : memref<18x18x128xf32, #tpu.memory_space<vmem>>, vector<16x16x128xf32>
    %c6 = arith.constant 6 : index
    %c0_57 = arith.constant 0 : index
    %56 = vector.load %arg2[%c6, %c0_57] : memref<9x128xf32, #tpu.memory_space<vmem>>, vector<1x128xf32>
    %57 = vector.shape_cast %56 : vector<1x128xf32> to vector<128xf32>
    %58 = vector.shape_cast %57 : vector<128xf32> to vector<1x1x128xf32>
    %59 = vector.broadcast %58 : vector<1x1x128xf32> to vector<16x16x128xf32>
    %60 = arith.mulf %55, %59 : vector<16x16x128xf32>
    %c2_58 = arith.constant 2 : index
    %c1_59 = arith.constant 1 : index
    %c0_60 = arith.constant 0 : index
    %61 = vector.load %arg7[%c2_58, %c1_59, %c0_60] : memref<18x18x128xf32, #tpu.memory_space<vmem>>, vector<16x16x128xf32>
    %c7 = arith.constant 7 : index
    %c0_61 = arith.constant 0 : index
    %62 = vector.load %arg2[%c7, %c0_61] : memref<9x128xf32, #tpu.memory_space<vmem>>, vector<1x128xf32>
    %63 = vector.shape_cast %62 : vector<1x128xf32> to vector<128xf32>
    %64 = vector.shape_cast %63 : vector<128xf32> to vector<1x1x128xf32>
    %65 = vector.broadcast %64 : vector<1x1x128xf32> to vector<16x16x128xf32>
    %66 = arith.mulf %61, %65 : vector<16x16x128xf32>
    %67 = arith.addf %60, %66 : vector<16x16x128xf32>
    %c2_62 = arith.constant 2 : index
    %c2_63 = arith.constant 2 : index
    %c0_64 = arith.constant 0 : index
    %68 = vector.load %arg7[%c2_62, %c2_63, %c0_64] : memref<18x18x128xf32, #tpu.memory_space<vmem>>, vector<16x16x128xf32>
    %c8 = arith.constant 8 : index
    %c0_65 = arith.constant 0 : index
    %69 = vector.load %arg2[%c8, %c0_65] : memref<9x128xf32, #tpu.memory_space<vmem>>, vector<1x128xf32>
    %70 = vector.shape_cast %69 : vector<1x128xf32> to vector<128xf32>
    %71 = vector.shape_cast %70 : vector<128xf32> to vector<1x1x128xf32>
    %72 = vector.broadcast %71 : vector<1x1x128xf32> to vector<16x16x128xf32>
    %73 = arith.mulf %68, %72 : vector<16x16x128xf32>
    %74 = arith.addf %67, %73 : vector<16x16x128xf32>
    %c0_66 = arith.constant 0 : index
    %c0_67 = arith.constant 0 : index
    %c0_68 = arith.constant 0 : index
    %75 = vector.load %arg8[%c0_66, %c0_67, %c0_68] : memref<16x16x128xf32, #tpu.memory_space<vmem>>, vector<16x16x128xf32>
    %76 = arith.addf %75, %74 : vector<16x16x128xf32>
    %c0_69 = arith.constant 0 : index
    %c0_70 = arith.constant 0 : index
    %c0_71 = arith.constant 0 : index
    %77 = vector.load %arg8[%c0_69, %c0_70, %c0_71] : memref<16x16x128xf32, #tpu.memory_space<vmem>>, vector<16x16x128xf32>
    tpu.vector_store %arg8[%c0_69, %c0_70, %c0_71], %76 {strides = array<i32>} : memref<16x16x128xf32, #tpu.memory_space<vmem>>, vector<16x16x128xf32>,
    %c0_72 = arith.constant 0 : index
    %c0_73 = arith.constant 0 : index
    %c0_74 = arith.constant 0 : index
    %78 = vector.load %arg8[%c0_72, %c0_73, %c0_74] : memref<16x16x128xf32, #tpu.memory_space<vmem>>, vector<16x16x128xf32>
    %c0_75 = arith.constant 0 : index
    %c0_76 = arith.constant 0 : index
    %79 = vector.load %arg3[%c0_75, %c0_76] : memref<1x128xf32, #tpu.memory_space<vmem>>, vector<1x128xf32>
    %80 = vector.shape_cast %79 : vector<1x128xf32> to vector<1x1x128xf32>
    %81 = vector.broadcast %80 : vector<1x1x128xf32> to vector<16x16x128xf32>
    %82 = arith.addf %78, %81 : vector<16x16x128xf32>
    %cst_77 = arith.constant 0.000000e+00 : f32
    %83 = vector.broadcast %cst_77 : f32 to vector<16x16x128xf32>
    %84 = arith.subf %83, %82 : vector<16x16x128xf32>
    %85 = math.exp %84 : vector<16x16x128xf32>
    %cst_78 = arith.constant 1.000000e+00 : f32
    %86 = vector.broadcast %cst_78 : f32 to vector<16x16x128xf32>
    %87 = arith.addf %86, %85 : vector<16x16x128xf32>
    %cst_79 = arith.constant 1.000000e+00 : f32
    %88 = vector.broadcast %cst_79 : f32 to vector<16x16x128xf32>
    %89 = arith.divf %88, %87 : vector<16x16x128xf32>
    %90 = arith.mulf %82, %89 : vector<16x16x128xf32>
    %91 = arith.truncf %90 : vector<16x16x128xf32> to vector<16x16x128xbf16>
    %92 = vector.shape_cast %91 : vector<16x16x128xbf16> to vector<256x128xbf16>
    %c0_80 = arith.constant 0 : index
    %c0_81 = arith.constant 0 : index
    %93 = vector.load %arg4[%c0_80, %c0_81] : memref<128x128xbf16, #tpu.memory_space<vmem>>, vector<128x128xbf16>
    %cst_82 = arith.constant dense<0.000000e+00> : vector<256x128xf32>
    %94 = tpu.matmul %92, %93, %cst_82 {dimension_numbers = #tpu.dot_dimension_numbers<[1], [0], [0], [1], [0, 0, 1, 1], [], []>} : vector<256x128xbf16>, vector<128x128xbf16>, vector<256x128xf32> -> vector<256x128xf32>
    %c0_83 = arith.constant 0 : index
    %c0_84 = arith.constant 0 : index
    %95 = vector.load %arg5[%c0_83, %c0_84] : memref<1x128xf32, #tpu.memory_space<vmem>>, vector<1x128xf32>
    %96 = vector.broadcast %95 : vector<1x128xf32> to vector<256x128xf32>
    %97 = arith.addf %94, %96 : vector<256x128xf32>
    %cst_85 = arith.constant 0.000000e+00 : f32
    %98 = vector.broadcast %cst_85 : f32 to vector<256x128xf32>
    %99 = arith.subf %98, %97 : vector<256x128xf32>
    %100 = math.exp %99 : vector<256x128xf32>
    %cst_86 = arith.constant 1.000000e+00 : f32
    %101 = vector.broadcast %cst_86 : f32 to vector<256x128xf32>
    %102 = arith.addf %101, %100 : vector<256x128xf32>
    %cst_87 = arith.constant 1.000000e+00 : f32
    %103 = vector.broadcast %cst_87 : f32 to vector<256x128xf32>
    %104 = arith.divf %103, %102 : vector<256x128xf32>
    %105 = arith.mulf %97, %104 : vector<256x128xf32>
    %106 = vector.shape_cast %105 : vector<256x128xf32> to vector<16x16x128xf32>
    %c0_88 = arith.constant 0 : index
    %c0_89 = arith.constant 0 : index
    %c0_90 = arith.constant 0 : index
    %c0_91 = arith.constant 0 : index
    %107 = vector.load %arg6[%c0_88, %c0_89, %c0_90, %c0_91] : memref<1x16x16x128xf32, #tpu.memory_space<vmem>>, vector<1x16x16x128xf32>
    %108 = vector.shape_cast %107 : vector<1x16x16x128xf32> to vector<16x16x128xf32>
    %109 = vector.shape_cast %106 : vector<16x16x128xf32> to vector<1x16x16x128xf32>
    tpu.vector_store %arg6[%c0_88, %c0_89, %c0_90, %c0_91], %109 {strides = array<i32>} : memref<1x16x16x128xf32, #tpu.memory_space<vmem>>, vector<1x16x16x128xf32>,
    return
  }
  func.func @transform_0(%arg0: i32) -> (i32, i32, i32, i32) {
    %c0_i32 = arith.constant 0 : i32
    %c0_i32_0 = arith.constant 0 : i32
    %c0_i32_1 = arith.constant 0 : i32
    %c0_i32_2 = arith.constant 0 : i32
    return %arg0, %c0_i32, %c0_i32_0, %c0_i32_1 : i32, i32, i32, i32
  }
  func.func @transform_1(%arg0: i32) -> (i32, i32) {
    %c0_i32 = arith.constant 0 : i32
    %c0_i32_0 = arith.constant 0 : i32
    %c0_i32_1 = arith.constant 0 : i32
    return %c0_i32, %c0_i32_0 : i32, i32
  }
  func.func @transform_2(%arg0: i32) -> (i32, i32) {
    %c0_i32 = arith.constant 0 : i32
    %c0_i32_0 = arith.constant 0 : i32
    %c0_i32_1 = arith.constant 0 : i32
    return %c0_i32, %c0_i32_0 : i32, i32
  }
  func.func @transform_3(%arg0: i32) -> (i32, i32) {
    %c0_i32 = arith.constant 0 : i32
    %c0_i32_0 = arith.constant 0 : i32
    %c0_i32_1 = arith.constant 0 : i32
    return %c0_i32, %c0_i32_0 : i32, i32
  }
  func.func @transform_4(%arg0: i32) -> (i32, i32) {
    %c0_i32 = arith.constant 0 : i32
    %c0_i32_0 = arith.constant 0 : i32
    %c0_i32_1 = arith.constant 0 : i32
    return %c0_i32, %c0_i32_0 : i32, i32
  }
  func.func @transform_5(%arg0: i32) -> (i32, i32, i32, i32) {
    %c0_i32 = arith.constant 0 : i32
    %c0_i32_0 = arith.constant 0 : i32
    %c0_i32_1 = arith.constant 0 : i32
    %c0_i32_2 = arith.constant 0 : i32
    return %arg0, %c0_i32, %c0_i32_0, %c0_i32_1 : i32, i32, i32, i32
  }
}

</mosaic_0001>

<llo_original>
// kernel: tpu_custom_call.1
$region0: #{tpu_custom_call.1}
  #allocation0 [shape = 'u32[]', space=smem, size = 0x4, offset = 0x4, fixed_abs, tag = 'smem constant byte address 0x4 - core index']
  #allocation1 [shape = 'u32[144,128]{1,0:T(1,128)}', space=vmem, size = 0x12000, scoped, tag = 'internal scratch']
  #allocation2 [shape = 'f32[18,18,128]{2,1,0:T(8,128)}', space=vmem, size = 0x36000, scoped, tag = 'scratch operand']
  #allocation3 [shape = 'f32[16,16,128]{2,1,0:T(8,128)}', space=vmem, size = 0x20000, scoped, tag = 'scratch operand']
  %s0 = inlined_call_operand.hbm [shape: f32[2,16,16,128], index: 0, kind: input, shape index: {}]
  %s1 = inlined_call_operand.hbm [shape: f32[9,128], index: 1, kind: input, shape index: {}]
  %s2 = inlined_call_operand.vmem [shape: f32[1,128], index: 2, kind: input, shape index: {}]
  %s3 = inlined_call_operand.hbm [shape: bf16[128,128], index: 3, kind: input, shape index: {}]
  %s4 = inlined_call_operand.vmem [shape: f32[1,128], index: 4, kind: input, shape index: {}]
  %s5 = inlined_call_operand.hbm [shape: f32[2,16,16,128], index: 5, kind: output, shape index: {}]
  %s6 = sld [smem:[#allocation0]]
  $region65: #{tpu_custom_call.1} parent=0
    _
  %s8 = ssub.s32 1, %s6
  %s9 = scalar_select 0, %s8, %s6
  $region1: #{tpu_custom_call.1} parent=0
    #allocation4 [shape = 'u8[262144]{0}', space=vmem, size = 0x40000, scoped, tag = 'input window, operand 0']
    #allocation5 [shape = 's32[2]{0}', space=sflag, size = 0x8, scoped, tag = 'scoped memory for tpu_custom_call.1']
    #allocation6 [shape = 's32[2]{0}', space=sflag, size = 0x8, scoped, tag = 'scoped memory for tpu_custom_call.1']
    #allocation7 [shape = 'u8[8192]{0}', space=vmem, size = 0x2000, scoped, tag = 'input window, operand 1, single buffered']
    #allocation8 [shape = 's32[1]{0}', space=sflag, size = 0x4, scoped, tag = 'scoped memory for tpu_custom_call.1']
    #allocation9 [shape = 'u8[32768]{0}', space=vmem, size = 0x8000, scoped, tag = 'input window, operand 3, single buffered']
    #allocation10 [shape = 'u8[262144]{0}', space=vmem, size = 0x40000, scoped, tag = 'output window, operand 0']
    %10 = vsyncpa [#allocation5], 0
    %s11 = scalar_lea.sflag [#allocation5], 1
    %12 = vsyncpa %s11, 0
    %13 = vsyncpa [#allocation8], 0
    %14 = vsyncpa [#allocation6], 0
    %s15 = scalar_lea.sflag [#allocation6], 1
    %16 = vsyncpa %s15, 0
    loop: start=0, step=1, limit=4
    $region2: #{tpu_custom_call.1} parent=1 // loop_pre_header
      _
    $region3: #{tpu_custom_call.1} parent=1 // loop_header
      %s18 = sphi 0, %s22
      %p19 = scmp.ge.s32.totalorder %s18, 4
      %s28 = sphi 0, %s30
      %s31 = sphi 0, %s28
      %s32 = sphi 0, %s31
      %s48 = sphi 0, %s32
      %s52 = sphi 0, %s52
      %s54 = sphi 0, %s52
      %s55 = sphi 0, %s54
      %s69 = sphi 0, %s55
      %s73 = sphi 0, %s73
      %s75 = sphi 0, %s73
      %s76 = sphi 0, %s75
      %s90 = sphi 0, %s76
      %s94 = sphi 0, %s94
      %s96 = sphi 0, %s94
      %s97 = sphi 0, %s96
      %s111 = sphi 0, %s97
      %s115 = sphi 0, %s115
      %s117 = sphi 0, %s115
      %s118 = sphi 0, %s117
      %s132 = sphi 0, %s118
      %s138 = sphi 0, %s140
      %s141 = sphi 0, %s138
      %s142 = sphi 0, %s141
      %s158 = sphi 0, %s142
    $region4: #{tpu_custom_call.1} parent=1 // loop_header_branch
      %21 = sbr.rel (%p19) target = $region8
    $region5: #{tpu_custom_call.1} parent=1 // loop_body
      %s23 = ssub.s32 %s18, 1
      %s24 = ssub.s32 %s18, 2
      %s25 = sadd.s32 %s18, 1
      %s26 = ssub.s32 %s18, %s25
      %p27 = scmp.eq.s32.totalorder %s26, 0
      %s29 = sadd.s32 %s28, 1
      %s30 = scalar_select %p27, %s28, %s29
      %p33 = pneg %p27
      %p34 = scmp.eq.s32.totalorder %s18, 1
      %p35 = por %p33, %p34
      %p36 = scmp.ne.s32.totalorder %s28, %s31
      %p37 = scmp.eq.s32.totalorder %s18, 0
      %p38 = por %p36, %p37
      %p39 = scmp.ne.s32.totalorder %s28, %s31
      %p40 = scmp.eq.s32.totalorder %s23, 1
      %p41 = por %p39, %p40
      %p42 = scmp.ne.s32.totalorder %s31, %s32
      %p43 = scmp.eq.s32.totalorder %s23, 0
      %p44 = por %p42, %p43
      %p45 = scmp.ne.s32.totalorder %s31, %s32
      %p46 = scmp.eq.s32.totalorder %s24, 1
      %p47 = por %p45, %p46
      %p49 = scmp.ne.s32.totalorder %s32, %s48
      %p50 = scmp.eq.s32.totalorder %s24, 0
      %p51 = por %p49, %p50
      %s53 = sadd.s32 %s52, 1
      %p56 = scmp.eq.s32.totalorder %s18, 1
      %p57 = scmp.ne.s32.totalorder %s52, %s54
      %p58 = scmp.eq.s32.totalorder %s18, 0
      %p59 = por %p57, %p58
      %p60 = scmp.ne.s32.totalorder %s52, %s54
      %p61 = scmp.eq.s32.totalorder %s23, 1
      %p62 = por %p60, %p61
      %p63 = scmp.ne.s32.totalorder %s54, %s55
      %p64 = scmp.eq.s32.totalorder %s23, 0
      %p65 = por %p63, %p64
      %p66 = scmp.ne.s32.totalorder %s54, %s55
      %p67 = scmp.eq.s32.totalorder %s24, 1
      %p68 = por %p66, %p67
      %p70 = scmp.ne.s32.totalorder %s55, %s69
      %p71 = scmp.eq.s32.totalorder %s24, 0
      %p72 = por %p70, %p71
      %s74 = sadd.s32 %s73, 1
      %p77 = scmp.eq.s32.totalorder %s18, 1
      %p78 = scmp.ne.s32.totalorder %s73, %s75
      %p79 = scmp.eq.s32.totalorder %s18, 0
      %p80 = por %p78, %p79
      %p81 = scmp.ne.s32.totalorder %s73, %s75
      %p82 = scmp.eq.s32.totalorder %s23, 1
      %p83 = por %p81, %p82
      %p84 = scmp.ne.s32.totalorder %s75, %s76
      %p85 = scmp.eq.s32.totalorder %s23, 0
      %p86 = por %p84, %p85
      %p87 = scmp.ne.s32.totalorder %s75, %s76
      %p88 = scmp.eq.s32.totalorder %s24, 1
      %p89 = por %p87, %p88
      %p91 = scmp.ne.s32.totalorder %s76, %s90
      %p92 = scmp.eq.s32.totalorder %s24, 0
      %p93 = por %p91, %p92
      %s95 = sadd.s32 %s94, 1
      %p98 = scmp.eq.s32.totalorder %s18, 1
      %p99 = scmp.ne.s32.totalorder %s94, %s96
      %p100 = scmp.eq.s32.totalorder %s18, 0
      %p101 = por %p99, %p100
      %p102 = scmp.ne.s32.totalorder %s94, %s96
      %p103 = scmp.eq.s32.totalorder %s23, 1
      %p104 = por %p102, %p103
      %p105 = scmp.ne.s32.totalorder %s96, %s97
      %p106 = scmp.eq.s32.totalorder %s23, 0
      %p107 = por %p105, %p106
      %p108 = scmp.ne.s32.totalorder %s96, %s97
      %p109 = scmp.eq.s32.totalorder %s24, 1
      %p110 = por %p108, %p109
      %p112 = scmp.ne.s32.totalorder %s97, %s111
      %p113 = scmp.eq.s32.totalorder %s24, 0
      %p114 = por %p112, %p113
      %s116 = sadd.s32 %s115, 1
      %p119 = scmp.eq.s32.totalorder %s18, 1
      %p120 = scmp.ne.s32.totalorder %s115, %s117
      %p121 = scmp.eq.s32.totalorder %s18, 0
      %p122 = por %p120, %p121
      %p123 = scmp.ne.s32.totalorder %s115, %s117
      %p124 = scmp.eq.s32.totalorder %s23, 1
      %p125 = por %p123, %p124
      %p126 = scmp.ne.s32.totalorder %s117, %s118
      %p127 = scmp.eq.s32.totalorder %s23, 0
      %p128 = por %p126, %p127
      %p129 = scmp.ne.s32.totalorder %s117, %s118
      %p130 = scmp.eq.s32.totalorder %s24, 1
      %p131 = por %p129, %p130
      %p133 = scmp.ne.s32.totalorder %s118, %s132
      %p134 = scmp.eq.s32.totalorder %s24, 0
      %p135 = por %p133, %p134
      %s136 = ssub.s32 %s18, %s25
      %p137 = scmp.eq.s32.totalorder %s136, 0
      %s139 = sadd.s32 %s138, 1
      %s140 = scalar_select %p137, %s138, %s139
      %p143 = pneg %p137
      %p144 = scmp.eq.s32.totalorder %s18, 1
      %p145 = por %p143, %p144
      %p146 = scmp.ne.s32.totalorder %s138, %s141
      %p147 = scmp.eq.s32.totalorder %s18, 0
      %p148 = por %p146, %p147
      %p149 = scmp.ne.s32.totalorder %s138, %s141
      %p150 = scmp.eq.s32.totalorder %s23, 1
      %p151 = por %p149, %p150
      %p152 = scmp.ne.s32.totalorder %s141, %s142
      %p153 = scmp.eq.s32.totalorder %s23, 0
      %p154 = por %p152, %p153
      %p155 = scmp.ne.s32.totalorder %s141, %s142
      %p156 = scmp.eq.s32.totalorder %s24, 1
      %p157 = por %p155, %p156
      %p159 = scmp.ne.s32.totalorder %s142, %s158
      %p160 = scmp.eq.s32.totalorder %s24, 0
      %p161 = por %p159, %p160
      %p162 = scmp.le.s32.totalorder 1, %s18
      %p163 = scmp.lt.s32.totalorder %s18, 3
      %p164 = pnand %p162, %p163
      %p165 = pneg %p164
      // Predicated region
      $region9: #{tpu_custom_call.1} parent=5 // pred_check
        _
      $region10: #{tpu_custom_call.1} parent=5 // pred_check_branch
        %167 = sbr.rel (%p164) target = $region12
      $region11: #{tpu_custom_call.1} parent=5 // pred_region
        %s168 = ssub.s32 %s18, 1
        // Predicated region
        $region13: #{tpu_custom_call.1} parent=11 // pred_check
          %p169 = pneg %p65
        $region14: #{tpu_custom_call.1} parent=11 // pred_check_branch
          %171 = sbr.rel (%p169) target = $region16
        $region15: #{tpu_custom_call.1} parent=11 // pred_region
          %s173 = ssub.s32 256, 256
          %174 = vsyncadd [#allocation8], %s173
          %s175 = sshll.u32 [#allocation7], 4
          %s176 = int_to_ptr.vmem [resolvable:$true] %s175
          %181 = dma.hbm_to_vmem [thread:$0]  %s1, 256, %s176, [#allocation8], 128, 128, 8
        $region16: #{tpu_custom_call.1} parent=11 // pred_fallthru
          _
        // Predicated region
        $region17: #{tpu_custom_call.1} parent=11 // pred_check
          %p182 = pneg %p86
        $region18: #{tpu_custom_call.1} parent=11 // pred_check_branch
          %184 = sbr.rel (%p182) target = $region20
        $region19: #{tpu_custom_call.1} parent=11 // pred_region
          _
        $region20: #{tpu_custom_call.1} parent=11 // pred_fallthru
          _
        // Predicated region
        $region21: #{tpu_custom_call.1} parent=11 // pred_check
          %p185 = pneg %p107
        $region22: #{tpu_custom_call.1} parent=11 // pred_check_branch
          %187 = sbr.rel (%p185) target = $region24
        $region23: #{tpu_custom_call.1} parent=11 // pred_region
          %s189 = ssub.s32 1024, 1024
          %190 = vsyncadd [#allocation8], %s189
          %s191 = sshll.u32 [#allocation9], 4
          %s192 = int_to_ptr.vmem [resolvable:$true] %s191
          %197 = dma.hbm_to_vmem [thread:$0]  %s3, 1024, %s192, [#allocation8], 64, 64, 4
        $region24: #{tpu_custom_call.1} parent=11 // pred_fallthru
          _
        // Predicated region
        $region25: #{tpu_custom_call.1} parent=11 // pred_check
          %p198 = pneg %p128
        $region26: #{tpu_custom_call.1} parent=11 // pred_check_branch
          %200 = sbr.rel (%p198) target = $region28
        $region27: #{tpu_custom_call.1} parent=11 // pred_region
          _
        $region28: #{tpu_custom_call.1} parent=11 // pred_fallthru
          _
      $region12: #{tpu_custom_call.1} parent=5 // pred_fallthru
        _
      %p201 = scmp.lt.s32.totalorder %s18, 2
      // Predicated region
      $region29: #{tpu_custom_call.1} parent=5 // pred_check
        %p202 = pneg %p201
      $region30: #{tpu_custom_call.1} parent=5 // pred_check_branch
        %204 = sbr.rel (%p202) target = $region32
      $region31: #{tpu_custom_call.1} parent=5 // pred_region
        // Predicated region
        $region33: #{tpu_custom_call.1} parent=31 // pred_check
          %p205 = pneg %p38
        $region34: #{tpu_custom_call.1} parent=31 // pred_check_branch
          %207 = sbr.rel (%p205) target = $region36
        $region35: #{tpu_custom_call.1} parent=31 // pred_region
          %s208 = sand.u32 %s28, 1
          %s209 = scalar_lea.sflag [#allocation5], %s208
          %s210 = sand.u32 %s28, 1
          %s211 = smul.addr %s210, 256
          %s212 = scalar_lea.vmem [#allocation4], %s211
          %s214 = ssub.s32 4096, 4096
          %215 = vsyncadd %s209, %s214
          %s216 = smul.addr %s18, 32
          %s217 = smul.addr %s216, 128
          %s218 = scalar_lea.hbm %s0, %s217
          %s219 = sshll.u32 %s212, 4
          %s220 = int_to_ptr.vmem [resolvable:$true] %s219
          %225 = dma.hbm_to_vmem [thread:$0]  %s218, 4096, %s220, %s209, 128, 128, 8
        $region36: #{tpu_custom_call.1} parent=31 // pred_fallthru
          _
      $region32: #{tpu_custom_call.1} parent=5 // pred_fallthru
        _
      %p226 = scmp.le.s32.totalorder 1, %s18
      %p227 = scmp.lt.s32.totalorder %s18, 3
      %p228 = pnand %p226, %p227
      %p229 = pneg %p228
      // Predicated region
      $region37: #{tpu_custom_call.1} parent=5 // pred_check
        _
      $region38: #{tpu_custom_call.1} parent=5 // pred_check_branch
        %231 = sbr.rel (%p228) target = $region40
      $region39: #{tpu_custom_call.1} parent=5 // pred_region
        %s232 = ssub.s32 %s18, 1
        %s233 = sand.u32 %s31, 1
        %s234 = scalar_lea.sflag [#allocation5], %s233
        %s235 = sand.u32 %s31, 1
        %s236 = smul.addr %s235, 256
        %s237 = scalar_lea.vmem [#allocation4], %s236
        // Predicated region
        $region41: #{tpu_custom_call.1} parent=39 // pred_check
          %p238 = pneg %p44
        $region42: #{tpu_custom_call.1} parent=39 // pred_check_branch
          %240 = sbr.rel (%p238) target = $region44
        $region43: #{tpu_custom_call.1} parent=39 // pred_region
          %241 = dma.done %s234, 4096
        $region44: #{tpu_custom_call.1} parent=39 // pred_fallthru
          _
        // Predicated region
        $region45: #{tpu_custom_call.1} parent=39 // pred_check
          %p242 = pneg %p65
        $region46: #{tpu_custom_call.1} parent=39 // pred_check_branch
          %244 = sbr.rel (%p242) target = $region48
        $region47: #{tpu_custom_call.1} parent=39 // pred_region
          %245 = dma.done [#allocation8], 256
        $region48: #{tpu_custom_call.1} parent=39 // pred_fallthru
          _
        // Predicated region
        $region49: #{tpu_custom_call.1} parent=39 // pred_check
          %p246 = pneg %p107
        $region50: #{tpu_custom_call.1} parent=39 // pred_check_branch
          %248 = sbr.rel (%p246) target = $region52
        $region51: #{tpu_custom_call.1} parent=39 // pred_region
          %249 = dma.done [#allocation8], 1024
        $region52: #{tpu_custom_call.1} parent=39 // pred_fallthru
          _
        %s250 = sand.u32 %s31, 1
        %s251 = scalar_lea.sflag [#allocation5], %s250
        %s252 = sand.u32 %s31, 1
        %s253 = smul.addr %s252, 256
        %s254 = scalar_lea.vmem [#allocation4], %s253
        %p255 = pneg %p44
        %p256 = pneg %p41
        %p257 = pneg %p65
        %p258 = pneg %p62
        %p259 = pneg %p86
        %p260 = pneg %p83
        %p261 = pneg %p107
        %p262 = pneg %p104
        %p263 = pneg %p128
        %p264 = pneg %p125
        %p265 = pneg %p154
        %p266 = pneg %p151
        %s267 = sand.u32 %s141, 1
        %s268 = scalar_lea.sflag [#allocation6], %s267
        %s269 = sand.u32 %s141, 1
        %s270 = smul.addr %s269, 256
        %s271 = scalar_lea.vmem [#allocation10], %s270
        %273 = vst [vmem:[#allocation2] sm:$0xff] 0.0
        %274 = vst [vmem:[#allocation2 + $0x8] sm:$0xff] 0.0
        %275 = vst [vmem:[#allocation2 + $0x10] sm:$0x3] 0.0
        %s276 = scalar_lea.vmem [#allocation2], 408
        %277 = vst [vmem:[%s276] sm:$0xff] 0.0
        %278 = vst [vmem:[%s276 + $0x8] sm:$0xff] 0.0
        %279 = vst [vmem:[%s276 + $0x10] sm:$0x3] 0.0
        %s280 = scalar_lea.vmem [#allocation2], 24
        %281 = vst [vmem:[%s280] sm:$0x1] 0.0
        %282 = vst [vmem:[%s280 + $0x18] sm:$0x1] 0.0
        %283 = vst [vmem:[%s280 + $0x30] sm:$0x1] 0.0
        %284 = vst [vmem:[%s280 + $0x48] sm:$0x1] 0.0
        %285 = vst [vmem:[%s280 + $0x60] sm:$0x1] 0.0
        %286 = vst [vmem:[%s280 + $0x78] sm:$0x1] 0.0
        %287 = vst [vmem:[%s280 + $0x90] sm:$0x1] 0.0
        %288 = vst [vmem:[%s280 + $0xa8] sm:$0x1] 0.0
        %289 = vst [vmem:[%s280 + $0xc0] sm:$0x1] 0.0
        %290 = vst [vmem:[%s280 + $0xd8] sm:$0x1] 0.0
        %291 = vst [vmem:[%s280 + $0xf0] sm:$0x1] 0.0
        %292 = vst [vmem:[%s280 + $0x108] sm:$0x1] 0.0
        %293 = vst [vmem:[%s280 + $0x120] sm:$0x1] 0.0
        %294 = vst [vmem:[%s280 + $0x138] sm:$0x1] 0.0
        %295 = vst [vmem:[%s280 + $0x150] sm:$0x1] 0.0
        %296 = vst [vmem:[%s280 + $0x168] sm:$0x1] 0.0
        %297 = vst [vmem:[%s280 + $0x11] sm:$0x1] 0.0
        %298 = vst [vmem:[%s280 + $0x29] sm:$0x1] 0.0
        %299 = vst [vmem:[%s280 + $0x41] sm:$0x1] 0.0
        %300 = vst [vmem:[%s280 + $0x59] sm:$0x1] 0.0
        %301 = vst [vmem:[%s280 + $0x71] sm:$0x1] 0.0
        %302 = vst [vmem:[%s280 + $0x89] sm:$0x1] 0.0
        %303 = vst [vmem:[%s280 + $0xa1] sm:$0x1] 0.0
        %304 = vst [vmem:[%s280 + $0xb9] sm:$0x1] 0.0
        %305 = vst [vmem:[%s280 + $0xd1] sm:$0x1] 0.0
        %306 = vst [vmem:[%s280 + $0xe9] sm:$0x1] 0.0
        %307 = vst [vmem:[%s280 + $0x101] sm:$0x1] 0.0
        %308 = vst [vmem:[%s280 + $0x119] sm:$0x1] 0.0
        %309 = vst [vmem:[%s280 + $0x131] sm:$0x1] 0.0
        %310 = vst [vmem:[%s280 + $0x149] sm:$0x1] 0.0
        %311 = vst [vmem:[%s280 + $0x161] sm:$0x1] 0.0
        %312 = vst [vmem:[%s280 + $0x179] sm:$0x1] 0.0
        %v313 = vld [vmem:[%s237] sm:$0xff]
        %v314 = vld [vmem:[%s237 + $0x8] sm:$0xff]
        %v315 = vld [vmem:[%s237 + $0x10] sm:$0xff]
        %v316 = vld [vmem:[%s237 + $0x18] sm:$0xff]
        %v317 = vld [vmem:[%s237 + $0x20] sm:$0xff]
        %v318 = vld [vmem:[%s237 + $0x28] sm:$0xff]
        %v319 = vld [vmem:[%s237 + $0x30] sm:$0xff]
        %v320 = vld [vmem:[%s237 + $0x38] sm:$0xff]
        %v321 = vld [vmem:[%s237 + $0x40] sm:$0xff]
        %v322 = vld [vmem:[%s237 + $0x48] sm:$0xff]
        %v323 = vld [vmem:[%s237 + $0x50] sm:$0xff]
        %v324 = vld [vmem:[%s237 + $0x58] sm:$0xff]
        %v325 = vld [vmem:[%s237 + $0x60] sm:$0xff]
        %v326 = vld [vmem:[%s237 + $0x68] sm:$0xff]
        %v327 = vld [vmem:[%s237 + $0x70] sm:$0xff]
        %v328 = vld [vmem:[%s237 + $0x78] sm:$0xff]
        %v329 = vld [vmem:[%s237 + $0x80] sm:$0xff]
        %v330 = vld [vmem:[%s237 + $0x88] sm:$0xff]
        %v331 = vld [vmem:[%s237 + $0x90] sm:$0xff]
        %v332 = vld [vmem:[%s237 + $0x98] sm:$0xff]
        %v333 = vld [vmem:[%s237 + $0xa0] sm:$0xff]
        %v334 = vld [vmem:[%s237 + $0xa8] sm:$0xff]
        %v335 = vld [vmem:[%s237 + $0xb0] sm:$0xff]
        %v336 = vld [vmem:[%s237 + $0xb8] sm:$0xff]
        %v337 = vld [vmem:[%s237 + $0xc0] sm:$0xff]
        %v338 = vld [vmem:[%s237 + $0xc8] sm:$0xff]
        %v339 = vld [vmem:[%s237 + $0xd0] sm:$0xff]
        %v340 = vld [vmem:[%s237 + $0xd8] sm:$0xff]
        %v341 = vld [vmem:[%s237 + $0xe0] sm:$0xff]
        %v342 = vld [vmem:[%s237 + $0xe8] sm:$0xff]
        %v343 = vld [vmem:[%s237 + $0xf0] sm:$0xff]
        %v344 = vld [vmem:[%s237 + $0xf8] sm:$0xff]
        %345 = vst [vmem:[%s280 + $0x1] sm:$0xff] %v313
        %346 = vst [vmem:[%s280 + $0x9] sm:$0xff] %v314
        %347 = vst [vmem:[%s280 + $0x19] sm:$0xff] %v315
        %348 = vst [vmem:[%s280 + $0x21] sm:$0xff] %v316
        %349 = vst [vmem:[%s280 + $0x31] sm:$0xff] %v317
        %350 = vst [vmem:[%s280 + $0x39] sm:$0xff] %v318
        %351 = vst [vmem:[%s280 + $0x49] sm:$0xff] %v319
        %352 = vst [vmem:[%s280 + $0x51] sm:$0xff] %v320
        %353 = vst [vmem:[%s280 + $0x61] sm:$0xff] %v321
        %354 = vst [vmem:[%s280 + $0x69] sm:$0xff] %v322
        %355 = vst [vmem:[%s280 + $0x79] sm:$0xff] %v323
        %356 = vst [vmem:[%s280 + $0x81] sm:$0xff] %v324
        %357 = vst [vmem:[%s280 + $0x91] sm:$0xff] %v325
        %358 = vst [vmem:[%s280 + $0x99] sm:$0xff] %v326
        %359 = vst [vmem:[%s280 + $0xa9] sm:$0xff] %v327
        %360 = vst [vmem:[%s280 + $0xb1] sm:$0xff] %v328
        %361 = vst [vmem:[%s280 + $0xc1] sm:$0xff] %v329
        %362 = vst [vmem:[%s280 + $0xc9] sm:$0xff] %v330
        %363 = vst [vmem:[%s280 + $0xd9] sm:$0xff] %v331
        %364 = vst [vmem:[%s280 + $0xe1] sm:$0xff] %v332
        %365 = vst [vmem:[%s280 + $0xf1] sm:$0xff] %v333
        %366 = vst [vmem:[%s280 + $0xf9] sm:$0xff] %v334
        %367 = vst [vmem:[%s280 + $0x109] sm:$0xff] %v335
        %368 = vst [vmem:[%s280 + $0x111] sm:$0xff] %v336
        %369 = vst [vmem:[%s280 + $0x121] sm:$0xff] %v337
        %370 = vst [vmem:[%s280 + $0x129] sm:$0xff] %v338
        %371 = vst [vmem:[%s280 + $0x139] sm:$0xff] %v339
        %372 = vst [vmem:[%s280 + $0x141] sm:$0xff] %v340
        %373 = vst [vmem:[%s280 + $0x151] sm:$0xff] %v341
        %374 = vst [vmem:[%s280 + $0x159] sm:$0xff] %v342
        %375 = vst [vmem:[%s280 + $0x169] sm:$0xff] %v343
        %376 = vst [vmem:[%s280 + $0x171] sm:$0xff] %v344
        %v377 = vld [vmem:[#allocation2] sm:$0xff]
        %v378 = vld [vmem:[#allocation2 + $0x8] sm:$0xff]
        %v379 = vld [vmem:[#allocation2 + $0x18] sm:$0xff]
        %v380 = vld [vmem:[#allocation2 + $0x20] sm:$0xff]
        %v381 = vld [vmem:[#allocation2 + $0x30] sm:$0xff]
        %v382 = vld [vmem:[#allocation2 + $0x38] sm:$0xff]
        %v383 = vld [vmem:[#allocation2 + $0x48] sm:$0xff]
        %v384 = vld [vmem:[#allocation2 + $0x50] sm:$0xff]
        %v385 = vld [vmem:[#allocation2 + $0x60] sm:$0xff]
        %v386 = vld [vmem:[#allocation2 + $0x68] sm:$0xff]
        %v387 = vld [vmem:[#allocation2 + $0x78] sm:$0xff]
        %v388 = vld [vmem:[#allocation2 + $0x80] sm:$0xff]
        %v389 = vld [vmem:[#allocation2 + $0x90] sm:$0xff]
        %v390 = vld [vmem:[#allocation2 + $0x98] sm:$0xff]
        %v391 = vld [vmem:[#allocation2 + $0xa8] sm:$0xff]
        %v392 = vld [vmem:[#allocation2 + $0xb0] sm:$0xff]
        %v393 = vld [vmem:[#allocation2 + $0xc0] sm:$0xff]
        %v394 = vld [vmem:[#allocation2 + $0xc8] sm:$0xff]
        %v395 = vld [vmem:[#allocation2 + $0xd8] sm:$0xff]
        %v396 = vld [vmem:[#allocation2 + $0xe0] sm:$0xff]
        %v397 = vld [vmem:[#allocation2 + $0xf0] sm:$0xff]
        %v398 = vld [vmem:[#allocation2 + $0xf8] sm:$0xff]
        %v399 = vld [vmem:[#allocation2 + $0x108] sm:$0xff]
        %v400 = vld [vmem:[#allocation2 + $0x110] sm:$0xff]
        %v401 = vld [vmem:[#allocation2 + $0x120] sm:$0xff]
        %v402 = vld [vmem:[#allocation2 + $0x128] sm:$0xff]
        %v403 = vld [vmem:[#allocation2 + $0x138] sm:$0xff]
        %v404 = vld [vmem:[#allocation2 + $0x140] sm:$0xff]
        %v405 = vld [vmem:[#allocation2 + $0x150] sm:$0xff]
        %v406 = vld [vmem:[#allocation2 + $0x158] sm:$0xff]
        %v407 = vld [vmem:[#allocation2 + $0x168] sm:$0xff]
        %v408 = vld [vmem:[#allocation2 + $0x170] sm:$0xff]
        %v409 = vld [vmem:[#allocation7] sm:$0x1]
        %v410 = vlaneseq
        %v411 = vshrl.u32 %v410, 7
        %v412 = vsub.s32 0, %v411
        %v413 = vrot.slane %v409, %v412
        %v414 = vmul.f32 %v377, %v413
        %v415 = vmul.f32 %v378, %v413
        %v416 = vmul.f32 %v379, %v413
        %v417 = vmul.f32 %v380, %v413
        %v418 = vmul.f32 %v381, %v413
        %v419 = vmul.f32 %v382, %v413
        %v420 = vmul.f32 %v383, %v413
        %v421 = vmul.f32 %v384, %v413
        %v422 = vmul.f32 %v385, %v413
        %v423 = vmul.f32 %v386, %v413
        %v424 = vmul.f32 %v387, %v413
        %v425 = vmul.f32 %v388, %v413
        %v426 = vmul.f32 %v389, %v413
        %v427 = vmul.f32 %v390, %v413
        %v428 = vmul.f32 %v391, %v413
        %v429 = vmul.f32 %v392, %v413
        %v430 = vmul.f32 %v393, %v413
        %v431 = vmul.f32 %v394, %v413
        %v432 = vmul.f32 %v395, %v413
        %v433 = vmul.f32 %v396, %v413
        %v434 = vmul.f32 %v397, %v413
        %v435 = vmul.f32 %v398, %v413
        %v436 = vmul.f32 %v399, %v413
        %v437 = vmul.f32 %v400, %v413
        %v438 = vmul.f32 %v401, %v413
        %v439 = vmul.f32 %v402, %v413
        %v440 = vmul.f32 %v403, %v413
        %v441 = vmul.f32 %v404, %v413
        %v442 = vmul.f32 %v405, %v413
        %v443 = vmul.f32 %v406, %v413
        %v444 = vmul.f32 %v407, %v413
        %v445 = vmul.f32 %v408, %v413
        %v446 = vld [vmem:[#allocation2 + $0x1] sm:$0xff]
        %v447 = vld [vmem:[#allocation2 + $0x9] sm:$0xff]
        %v448 = vld [vmem:[#allocation2 + $0x19] sm:$0xff]
        %v449 = vld [vmem:[#allocation2 + $0x21] sm:$0xff]
        %v450 = vld [vmem:[#allocation2 + $0x31] sm:$0xff]
        %v451 = vld [vmem:[#allocation2 + $0x39] sm:$0xff]
        %v452 = vld [vmem:[#allocation2 + $0x49] sm:$0xff]
        %v453 = vld [vmem:[#allocation2 + $0x51] sm:$0xff]
        %v454 = vld [vmem:[#allocation2 + $0x61] sm:$0xff]
        %v455 = vld [vmem:[#allocation2 + $0x69] sm:$0xff]
        %v456 = vld [vmem:[#allocation2 + $0x79] sm:$0xff]
        %v457 = vld [vmem:[#allocation2 + $0x81] sm:$0xff]
        %v458 = vld [vmem:[#allocation2 + $0x91] sm:$0xff]
        %v459 = vld [vmem:[#allocation2 + $0x99] sm:$0xff]
        %v460 = vld [vmem:[#allocation2 + $0xa9] sm:$0xff]
        %v461 = vld [vmem:[#allocation2 + $0xb1] sm:$0xff]
        %v462 = vld [vmem:[#allocation2 + $0xc1] sm:$0xff]
        %v463 = vld [vmem:[#allocation2 + $0xc9] sm:$0xff]
        %v464 = vld [vmem:[#allocation2 + $0xd9] sm:$0xff]
        %v465 = vld [vmem:[#allocation2 + $0xe1] sm:$0xff]
        %v466 = vld [vmem:[#allocation2 + $0xf1] sm:$0xff]
        %v467 = vld [vmem:[#allocation2 + $0xf9] sm:$0xff]
        %v468 = vld [vmem:[#allocation2 + $0x109] sm:$0xff]
        %v469 = vld [vmem:[#allocation2 + $0x111] sm:$0xff]
        %v470 = vld [vmem:[#allocation2 + $0x121] sm:$0xff]
        %v471 = vld [vmem:[#allocation2 + $0x129] sm:$0xff]
        %v472 = vld [vmem:[#allocation2 + $0x139] sm:$0xff]
        %v473 = vld [vmem:[#allocation2 + $0x141] sm:$0xff]
        %v474 = vld [vmem:[#allocation2 + $0x151] sm:$0xff]
        %v475 = vld [vmem:[#allocation2 + $0x159] sm:$0xff]
        %v476 = vld [vmem:[#allocation2 + $0x169] sm:$0xff]
        %v477 = vld [vmem:[#allocation2 + $0x171] sm:$0xff]
        %v478 = vld [vmem:[#allocation7 + $0x1] sm:$0x1]
        %v479 = vlaneseq
        %v480 = vshrl.u32 %v479, 7
        %v481 = vsub.s32 0, %v480
        %v482 = vrot.slane %v478, %v481
        %v483 = vmul.f32 %v446, %v482
        %v484 = vmul.f32 %v447, %v482
        %v485 = vmul.f32 %v448, %v482
        %v486 = vmul.f32 %v449, %v482
        %v487 = vmul.f32 %v450, %v482
        %v488 = vmul.f32 %v451, %v482
        %v489 = vmul.f32 %v452, %v482
        %v490 = vmul.f32 %v453, %v482
        %v491 = vmul.f32 %v454, %v482
        %v492 = vmul.f32 %v455, %v482
        %v493 = vmul.f32 %v456, %v482
        %v494 = vmul.f32 %v457, %v482
        %v495 = vmul.f32 %v458, %v482
        %v496 = vmul.f32 %v459, %v482
        %v497 = vmul.f32 %v460, %v482
        %v498 = vmul.f32 %v461, %v482
        %v499 = vmul.f32 %v462, %v482
        %v500 = vmul.f32 %v463, %v482
        %v501 = vmul.f32 %v464, %v482
        %v502 = vmul.f32 %v465, %v482
        %v503 = vmul.f32 %v466, %v482
        %v504 = vmul.f32 %v467, %v482
        %v505 = vmul.f32 %v468, %v482
        %v506 = vmul.f32 %v469, %v482
        %v507 = vmul.f32 %v470, %v482
        %v508 = vmul.f32 %v471, %v482
        %v509 = vmul.f32 %v472, %v482
        %v510 = vmul.f32 %v473, %v482
        %v511 = vmul.f32 %v474, %v482
        %v512 = vmul.f32 %v475, %v482
        %v513 = vmul.f32 %v476, %v482
        %v514 = vmul.f32 %v477, %v482
        %v515 = vadd.f32 %v414, %v483
        %v516 = vadd.f32 %v415, %v484
        %v517 = vadd.f32 %v416, %v485
        %v518 = vadd.f32 %v417, %v486
        %v519 = vadd.f32 %v418, %v487
        %v520 = vadd.f32 %v419, %v488
        %v521 = vadd.f32 %v420, %v489
        %v522 = vadd.f32 %v421, %v490
        %v523 = vadd.f32 %v422, %v491
        %v524 = vadd.f32 %v423, %v492
        %v525 = vadd.f32 %v424, %v493
        %v526 = vadd.f32 %v425, %v494
        %v527 = vadd.f32 %v426, %v495
        %v528 = vadd.f32 %v427, %v496
        %v529 = vadd.f32 %v428, %v497
        %v530 = vadd.f32 %v429, %v498
        %v531 = vadd.f32 %v430, %v499
        %v532 = vadd.f32 %v431, %v500
        %v533 = vadd.f32 %v432, %v501
        %v534 = vadd.f32 %v433, %v502
        %v535 = vadd.f32 %v434, %v503
        %v536 = vadd.f32 %v435, %v504
        %v537 = vadd.f32 %v436, %v505
        %v538 = vadd.f32 %v437, %v506
        %v539 = vadd.f32 %v438, %v507
        %v540 = vadd.f32 %v439, %v508
        %v541 = vadd.f32 %v440, %v509
        %v542 = vadd.f32 %v441, %v510
        %v543 = vadd.f32 %v442, %v511
        %v544 = vadd.f32 %v443, %v512
        %v545 = vadd.f32 %v444, %v513
        %v546 = vadd.f32 %v445, %v514
        %v547 = vld [vmem:[#allocation2 + $0x2] sm:$0xff]
        %v548 = vld [vmem:[#allocation2 + $0xa] sm:$0xff]
        %v549 = vld [vmem:[#allocation2 + $0x1a] sm:$0xff]
        %v550 = vld [vmem:[#allocation2 + $0x22] sm:$0xff]
        %v551 = vld [vmem:[#allocation2 + $0x32] sm:$0xff]
        %v552 = vld [vmem:[#allocation2 + $0x3a] sm:$0xff]
        %v553 = vld [vmem:[#allocation2 + $0x4a] sm:$0xff]
        %v554 = vld [vmem:[#allocation2 + $0x52] sm:$0xff]
        %v555 = vld [vmem:[#allocation2 + $0x62] sm:$0xff]
        %v556 = vld [vmem:[#allocation2 + $0x6a] sm:$0xff]
        %v557 = vld [vmem:[#allocation2 + $0x7a] sm:$0xff]
        %v558 = vld [vmem:[#allocation2 + $0x82] sm:$0xff]
        %v559 = vld [vmem:[#allocation2 + $0x92] sm:$0xff]
        %v560 = vld [vmem:[#allocation2 + $0x9a] sm:$0xff]
        %v561 = vld [vmem:[#allocation2 + $0xaa] sm:$0xff]
        %v562 = vld [vmem:[#allocation2 + $0xb2] sm:$0xff]
        %v563 = vld [vmem:[#allocation2 + $0xc2] sm:$0xff]
        %v564 = vld [vmem:[#allocation2 + $0xca] sm:$0xff]
        %v565 = vld [vmem:[#allocation2 + $0xda] sm:$0xff]
        %v566 = vld [vmem:[#allocation2 + $0xe2] sm:$0xff]
        %v567 = vld [vmem:[#allocation2 + $0xf2] sm:$0xff]
        %v568 = vld [vmem:[#allocation2 + $0xfa] sm:$0xff]
        %v569 = vld [vmem:[#allocation2 + $0x10a] sm:$0xff]
        %v570 = vld [vmem:[#allocation2 + $0x112] sm:$0xff]
        %v571 = vld [vmem:[#allocation2 + $0x122] sm:$0xff]
        %v572 = vld [vmem:[#allocation2 + $0x12a] sm:$0xff]
        %v573 = vld [vmem:[#allocation2 + $0x13a] sm:$0xff]
        %v574 = vld [vmem:[#allocation2 + $0x142] sm:$0xff]
        %v575 = vld [vmem:[#allocation2 + $0x152] sm:$0xff]
        %v576 = vld [vmem:[#allocation2 + $0x15a] sm:$0xff]
        %v577 = vld [vmem:[#allocation2 + $0x16a] sm:$0xff]
        %v578 = vld [vmem:[#allocation2 + $0x172] sm:$0xff]
        %v579 = vld [vmem:[#allocation7 + $0x2] sm:$0x1]
        %v580 = vlaneseq
        %v581 = vshrl.u32 %v580, 7
        %v582 = vsub.s32 0, %v581
        %v583 = vrot.slane %v579, %v582
        %v584 = vmul.f32 %v547, %v583
        %v585 = vmul.f32 %v548, %v583
        %v586 = vmul.f32 %v549, %v583
        %v587 = vmul.f32 %v550, %v583
        %v588 = vmul.f32 %v551, %v583
        %v589 = vmul.f32 %v552, %v583
        %v590 = vmul.f32 %v553, %v583
        %v591 = vmul.f32 %v554, %v583
        %v592 = vmul.f32 %v555, %v583
        %v593 = vmul.f32 %v556, %v583
        %v594 = vmul.f32 %v557, %v583
        %v595 = vmul.f32 %v558, %v583
        %v596 = vmul.f32 %v559, %v583
        %v597 = vmul.f32 %v560, %v583
        %v598 = vmul.f32 %v561, %v583
        %v599 = vmul.f32 %v562, %v583
        %v600 = vmul.f32 %v563, %v583
        %v601 = vmul.f32 %v564, %v583
        %v602 = vmul.f32 %v565, %v583
        %v603 = vmul.f32 %v566, %v583
        %v604 = vmul.f32 %v567, %v583
        %v605 = vmul.f32 %v568, %v583
        %v606 = vmul.f32 %v569, %v583
        %v607 = vmul.f32 %v570, %v583
        %v608 = vmul.f32 %v571, %v583
        %v609 = vmul.f32 %v572, %v583
        %v610 = vmul.f32 %v573, %v583
        %v611 = vmul.f32 %v574, %v583
        %v612 = vmul.f32 %v575, %v583
        %v613 = vmul.f32 %v576, %v583
        %v614 = vmul.f32 %v577, %v583
        %v615 = vmul.f32 %v578, %v583
        %v616 = vadd.f32 %v515, %v584
        %v617 = vadd.f32 %v516, %v585
        %v618 = vadd.f32 %v517, %v586
        %v619 = vadd.f32 %v518, %v587
        %v620 = vadd.f32 %v519, %v588
        %v621 = vadd.f32 %v520, %v589
        %v622 = vadd.f32 %v521, %v590
        %v623 = vadd.f32 %v522, %v591
        %v624 = vadd.f32 %v523, %v592
        %v625 = vadd.f32 %v524, %v593
        %v626 = vadd.f32 %v525, %v594
        %v627 = vadd.f32 %v526, %v595
        %v628 = vadd.f32 %v527, %v596
        %v629 = vadd.f32 %v528, %v597
        %v630 = vadd.f32 %v529, %v598
        %v631 = vadd.f32 %v530, %v599
        %v632 = vadd.f32 %v531, %v600
        %v633 = vadd.f32 %v532, %v601
        %v634 = vadd.f32 %v533, %v602
        %v635 = vadd.f32 %v534, %v603
        %v636 = vadd.f32 %v535, %v604
        %v637 = vadd.f32 %v536, %v605
        %v638 = vadd.f32 %v537, %v606
        %v639 = vadd.f32 %v538, %v607
        %v640 = vadd.f32 %v539, %v608
        %v641 = vadd.f32 %v540, %v609
        %v642 = vadd.f32 %v541, %v610
        %v643 = vadd.f32 %v542, %v611
        %v644 = vadd.f32 %v543, %v612
        %v645 = vadd.f32 %v544, %v613
        %v646 = vadd.f32 %v545, %v614
        %v647 = vadd.f32 %v546, %v615
        %648 = vst [vmem:[#allocation3] sm:$0xff] %v616
        %649 = vst [vmem:[#allocation3 + $0x8] sm:$0xff] %v617
        %650 = vst [vmem:[#allocation3 + $0x10] sm:$0xff] %v618
        %651 = vst [vmem:[#allocation3 + $0x18] sm:$0xff] %v619
        %652 = vst [vmem:[#allocation3 + $0x20] sm:$0xff] %v620
        %653 = vst [vmem:[#allocation3 + $0x28] sm:$0xff] %v621
        %654 = vst [vmem:[#allocation3 + $0x30] sm:$0xff] %v622
        %655 = vst [vmem:[#allocation3 + $0x38] sm:$0xff] %v623
        %656 = vst [vmem:[#allocation3 + $0x40] sm:$0xff] %v624
        %657 = vst [vmem:[#allocation3 + $0x48] sm:$0xff] %v625
        %658 = vst [vmem:[#allocation3 + $0x50] sm:$0xff] %v626
        %659 = vst [vmem:[#allocation3 + $0x58] sm:$0xff] %v627
        %660 = vst [vmem:[#allocation3 + $0x60] sm:$0xff] %v628
        %661 = vst [vmem:[#allocation3 + $0x68] sm:$0xff] %v629
        %662 = vst [vmem:[#allocation3 + $0x70] sm:$0xff] %v630
        %663 = vst [vmem:[#allocation3 + $0x78] sm:$0xff] %v631
        %664 = vst [vmem:[#allocation3 + $0x80] sm:$0xff] %v632
        %665 = vst [vmem:[#allocation3 + $0x88] sm:$0xff] %v633
        %666 = vst [vmem:[#allocation3 + $0x90] sm:$0xff] %v634
        %667 = vst [vmem:[#allocation3 + $0x98] sm:$0xff] %v635
        %668 = vst [vmem:[#allocation3 + $0xa0] sm:$0xff] %v636
        %669 = vst [vmem:[#allocation3 + $0xa8] sm:$0xff] %v637
        %670 = vst [vmem:[#allocation3 + $0xb0] sm:$0xff] %v638
        %671 = vst [vmem:[#allocation3 + $0xb8] sm:$0xff] %v639
        %672 = vst [vmem:[#allocation3 + $0xc0] sm:$0xff] %v640
        %673 = vst [vmem:[#allocation3 + $0xc8] sm:$0xff] %v641
        %674 = vst [vmem:[#allocation3 + $0xd0] sm:$0xff] %v642
        %675 = vst [vmem:[#allocation3 + $0xd8] sm:$0xff] %v643
        %676 = vst [vmem:[#allocation3 + $0xe0] sm:$0xff] %v644
        %677 = vst [vmem:[#allocation3 + $0xe8] sm:$0xff] %v645
        %678 = vst [vmem:[#allocation3 + $0xf0] sm:$0xff] %v646
        %679 = vst [vmem:[#allocation3 + $0xf8] sm:$0xff] %v647
        %v680 = vld [vmem:[%s280] sm:$0xff]
        %v681 = vld [vmem:[%s280 + $0x8] sm:$0xff]
        %v682 = vld [vmem:[%s280 + $0x18] sm:$0xff]
        %v683 = vld [vmem:[%s280 + $0x20] sm:$0xff]
        %v684 = vld [vmem:[%s280 + $0x30] sm:$0xff]
        %v685 = vld [vmem:[%s280 + $0x38] sm:$0xff]
        %v686 = vld [vmem:[%s280 + $0x48] sm:$0xff]
        %v687 = vld [vmem:[%s280 + $0x50] sm:$0xff]
        %v688 = vld [vmem:[%s280 + $0x60] sm:$0xff]
        %v689 = vld [vmem:[%s280 + $0x68] sm:$0xff]
        %v690 = vld [vmem:[%s280 + $0x78] sm:$0xff]
        %v691 = vld [vmem:[%s280 + $0x80] sm:$0xff]
        %v692 = vld [vmem:[%s280 + $0x90] sm:$0xff]
        %v693 = vld [vmem:[%s280 + $0x98] sm:$0xff]
        %v694 = vld [vmem:[%s280 + $0xa8] sm:$0xff]
        %v695 = vld [vmem:[%s280 + $0xb0] sm:$0xff]
        %v696 = vld [vmem:[%s280 + $0xc0] sm:$0xff]
        %v697 = vld [vmem:[%s280 + $0xc8] sm:$0xff]
        %v698 = vld [vmem:[%s280 + $0xd8] sm:$0xff]
        %v699 = vld [vmem:[%s280 + $0xe0] sm:$0xff]
        %v700 = vld [vmem:[%s280 + $0xf0] sm:$0xff]
        %v701 = vld [vmem:[%s280 + $0xf8] sm:$0xff]
        %v702 = vld [vmem:[%s280 + $0x108] sm:$0xff]
        %v703 = vld [vmem:[%s280 + $0x110] sm:$0xff]
        %v704 = vld [vmem:[%s280 + $0x120] sm:$0xff]
        %v705 = vld [vmem:[%s280 + $0x128] sm:$0xff]
        %v706 = vld [vmem:[%s280 + $0x138] sm:$0xff]
        %v707 = vld [vmem:[%s280 + $0x140] sm:$0xff]
        %v708 = vld [vmem:[%s280 + $0x150] sm:$0xff]
        %v709 = vld [vmem:[%s280 + $0x158] sm:$0xff]
        %v710 = vld [vmem:[%s280 + $0x168] sm:$0xff]
        %v711 = vld [vmem:[%s280 + $0x170] sm:$0xff]
        %v712 = vld [vmem:[#allocation7 + $0x3] sm:$0x1]
        %v713 = vlaneseq
        %v714 = vshrl.u32 %v713, 7
        %v715 = vsub.s32 0, %v714
        %v716 = vrot.slane %v712, %v715
        %v717 = vmul.f32 %v680, %v716
        %v718 = vmul.f32 %v681, %v716
        %v719 = vmul.f32 %v682, %v716
        %v720 = vmul.f32 %v683, %v716
        %v721 = vmul.f32 %v684, %v716
        %v722 = vmul.f32 %v685, %v716
        %v723 = vmul.f32 %v686, %v716
        %v724 = vmul.f32 %v687, %v716
        %v725 = vmul.f32 %v688, %v716
        %v726 = vmul.f32 %v689, %v716
        %v727 = vmul.f32 %v690, %v716
        %v728 = vmul.f32 %v691, %v716
        %v729 = vmul.f32 %v692, %v716
        %v730 = vmul.f32 %v693, %v716
        %v731 = vmul.f32 %v694, %v716
        %v732 = vmul.f32 %v695, %v716
        %v733 = vmul.f32 %v696, %v716
        %v734 = vmul.f32 %v697, %v716
        %v735 = vmul.f32 %v698, %v716
        %v736 = vmul.f32 %v699, %v716
        %v737 = vmul.f32 %v700, %v716
        %v738 = vmul.f32 %v701, %v716
        %v739 = vmul.f32 %v702, %v716
        %v740 = vmul.f32 %v703, %v716
        %v741 = vmul.f32 %v704, %v716
        %v742 = vmul.f32 %v705, %v716
        %v743 = vmul.f32 %v706, %v716
        %v744 = vmul.f32 %v707, %v716
        %v745 = vmul.f32 %v708, %v716
        %v746 = vmul.f32 %v709, %v716
        %v747 = vmul.f32 %v710, %v716
        %v748 = vmul.f32 %v711, %v716
        %v749 = vld [vmem:[%s280 + $0x1] sm:$0xff]
        %v750 = vld [vmem:[%s280 + $0x9] sm:$0xff]
        %v751 = vld [vmem:[%s280 + $0x19] sm:$0xff]
        %v752 = vld [vmem:[%s280 + $0x21] sm:$0xff]
        %v753 = vld [vmem:[%s280 + $0x31] sm:$0xff]
        %v754 = vld [vmem:[%s280 + $0x39] sm:$0xff]
        %v755 = vld [vmem:[%s280 + $0x49] sm:$0xff]
        %v756 = vld [vmem:[%s280 + $0x51] sm:$0xff]
        %v757 = vld [vmem:[%s280 + $0x61] sm:$0xff]
        %v758 = vld [vmem:[%s280 + $0x69] sm:$0xff]
        %v759 = vld [vmem:[%s280 + $0x79] sm:$0xff]
        %v760 = vld [vmem:[%s280 + $0x81] sm:$0xff]
        %v761 = vld [vmem:[%s280 + $0x91] sm:$0xff]
        %v762 = vld [vmem:[%s280 + $0x99] sm:$0xff]
        %v763 = vld [vmem:[%s280 + $0xa9] sm:$0xff]
        %v764 = vld [vmem:[%s280 + $0xb1] sm:$0xff]
        %v765 = vld [vmem:[%s280 + $0xc1] sm:$0xff]
        %v766 = vld [vmem:[%s280 + $0xc9] sm:$0xff]
        %v767 = vld [vmem:[%s280 + $0xd9] sm:$0xff]
        %v768 = vld [vmem:[%s280 + $0xe1] sm:$0xff]
        %v769 = vld [vmem:[%s280 + $0xf1] sm:$0xff]
        %v770 = vld [vmem:[%s280 + $0xf9] sm:$0xff]
        %v771 = vld [vmem:[%s280 + $0x109] sm:$0xff]
        %v772 = vld [vmem:[%s280 + $0x111] sm:$0xff]
        %v773 = vld [vmem:[%s280 + $0x121] sm:$0xff]
        %v774 = vld [vmem:[%s280 + $0x129] sm:$0xff]
        %v775 = vld [vmem:[%s280 + $0x139] sm:$0xff]
        %v776 = vld [vmem:[%s280 + $0x141] sm:$0xff]
        %v777 = vld [vmem:[%s280 + $0x151] sm:$0xff]
        %v778 = vld [vmem:[%s280 + $0x159] sm:$0xff]
        %v779 = vld [vmem:[%s280 + $0x169] sm:$0xff]
        %v780 = vld [vmem:[%s280 + $0x171] sm:$0xff]
        %v781 = vld [vmem:[#allocation7 + $0x4] sm:$0x1]
        %v782 = vlaneseq
        %v783 = vshrl.u32 %v782, 7
        %v784 = vsub.s32 0, %v783
        %v785 = vrot.slane %v781, %v784
        %v786 = vmul.f32 %v749, %v785
        %v787 = vmul.f32 %v750, %v785
        %v788 = vmul.f32 %v751, %v785
        %v789 = vmul.f32 %v752, %v785
        %v790 = vmul.f32 %v753, %v785
        %v791 = vmul.f32 %v754, %v785
        %v792 = vmul.f32 %v755, %v785
        %v793 = vmul.f32 %v756, %v785
        %v794 = vmul.f32 %v757, %v785
        %v795 = vmul.f32 %v758, %v785
        %v796 = vmul.f32 %v759, %v785
        %v797 = vmul.f32 %v760, %v785
        %v798 = vmul.f32 %v761, %v785
        %v799 = vmul.f32 %v762, %v785
        %v800 = vmul.f32 %v763, %v785
        %v801 = vmul.f32 %v764, %v785
        %v802 = vmul.f32 %v765, %v785
        %v803 = vmul.f32 %v766, %v785
        %v804 = vmul.f32 %v767, %v785
        %v805 = vmul.f32 %v768, %v785
        %v806 = vmul.f32 %v769, %v785
        %v807 = vmul.f32 %v770, %v785
        %v808 = vmul.f32 %v771, %v785
        %v809 = vmul.f32 %v772, %v785
        %v810 = vmul.f32 %v773, %v785
        %v811 = vmul.f32 %v774, %v785
        %v812 = vmul.f32 %v775, %v785
        %v813 = vmul.f32 %v776, %v785
        %v814 = vmul.f32 %v777, %v785
        %v815 = vmul.f32 %v778, %v785
        %v816 = vmul.f32 %v779, %v785
        %v817 = vmul.f32 %v780, %v785
        %v818 = vadd.f32 %v717, %v786
        %v819 = vadd.f32 %v718, %v787
        %v820 = vadd.f32 %v719, %v788
        %v821 = vadd.f32 %v720, %v789
        %v822 = vadd.f32 %v721, %v790
        %v823 = vadd.f32 %v722, %v791
        %v824 = vadd.f32 %v723, %v792
        %v825 = vadd.f32 %v724, %v793
        %v826 = vadd.f32 %v725, %v794
        %v827 = vadd.f32 %v726, %v795
        %v828 = vadd.f32 %v727, %v796
        %v829 = vadd.f32 %v728, %v797
        %v830 = vadd.f32 %v729, %v798
        %v831 = vadd.f32 %v730, %v799
        %v832 = vadd.f32 %v731, %v800
        %v833 = vadd.f32 %v732, %v801
        %v834 = vadd.f32 %v733, %v802
        %v835 = vadd.f32 %v734, %v803
        %v836 = vadd.f32 %v735, %v804
        %v837 = vadd.f32 %v736, %v805
        %v838 = vadd.f32 %v737, %v806
        %v839 = vadd.f32 %v738, %v807
        %v840 = vadd.f32 %v739, %v808
        %v841 = vadd.f32 %v740, %v809
        %v842 = vadd.f32 %v741, %v810
        %v843 = vadd.f32 %v742, %v811
        %v844 = vadd.f32 %v743, %v812
        %v845 = vadd.f32 %v744, %v813
        %v846 = vadd.f32 %v745, %v814
        %v847 = vadd.f32 %v746, %v815
        %v848 = vadd.f32 %v747, %v816
        %v849 = vadd.f32 %v748, %v817
        %v850 = vld [vmem:[%s280 + $0x2] sm:$0xff]
        %v851 = vld [vmem:[%s280 + $0xa] sm:$0xff]
        %v852 = vld [vmem:[%s280 + $0x1a] sm:$0xff]
        %v853 = vld [vmem:[%s280 + $0x22] sm:$0xff]
        %v854 = vld [vmem:[%s280 + $0x32] sm:$0xff]
        %v855 = vld [vmem:[%s280 + $0x3a] sm:$0xff]
        %v856 = vld [vmem:[%s280 + $0x4a] sm:$0xff]
        %v857 = vld [vmem:[%s280 + $0x52] sm:$0xff]
        %v858 = vld [vmem:[%s280 + $0x62] sm:$0xff]
        %v859 = vld [vmem:[%s280 + $0x6a] sm:$0xff]
        %v860 = vld [vmem:[%s280 + $0x7a] sm:$0xff]
        %v861 = vld [vmem:[%s280 + $0x82] sm:$0xff]
        %v862 = vld [vmem:[%s280 + $0x92] sm:$0xff]
        %v863 = vld [vmem:[%s280 + $0x9a] sm:$0xff]
        %v864 = vld [vmem:[%s280 + $0xaa] sm:$0xff]
        %v865 = vld [vmem:[%s280 + $0xb2] sm:$0xff]
        %v866 = vld [vmem:[%s280 + $0xc2] sm:$0xff]
        %v867 = vld [vmem:[%s280 + $0xca] sm:$0xff]
        %v868 = vld [vmem:[%s280 + $0xda] sm:$0xff]
        %v869 = vld [vmem:[%s280 + $0xe2] sm:$0xff]
        %v870 = vld [vmem:[%s280 + $0xf2] sm:$0xff]
        %v871 = vld [vmem:[%s280 + $0xfa] sm:$0xff]
        %v872 = vld [vmem:[%s280 + $0x10a] sm:$0xff]
        %v873 = vld [vmem:[%s280 + $0x112] sm:$0xff]
        %v874 = vld [vmem:[%s280 + $0x122] sm:$0xff]
        %v875 = vld [vmem:[%s280 + $0x12a] sm:$0xff]
        %v876 = vld [vmem:[%s280 + $0x13a] sm:$0xff]
        %v877 = vld [vmem:[%s280 + $0x142] sm:$0xff]
        %v878 = vld [vmem:[%s280 + $0x152] sm:$0xff]
        %v879 = vld [vmem:[%s280 + $0x15a] sm:$0xff]
        %v880 = vld [vmem:[%s280 + $0x16a] sm:$0xff]
        %v881 = vld [vmem:[%s280 + $0x172] sm:$0xff]
        %v882 = vld [vmem:[#allocation7 + $0x5] sm:$0x1]
        %v883 = vlaneseq
        %v884 = vshrl.u32 %v883, 7
        %v885 = vsub.s32 0, %v884
        %v886 = vrot.slane %v882, %v885
        %v887 = vmul.f32 %v850, %v886
        %v888 = vmul.f32 %v851, %v886
        %v889 = vmul.f32 %v852, %v886
        %v890 = vmul.f32 %v853, %v886
        %v891 = vmul.f32 %v854, %v886
        %v892 = vmul.f32 %v855, %v886
        %v893 = vmul.f32 %v856, %v886
        %v894 = vmul.f32 %v857, %v886
        %v895 = vmul.f32 %v858, %v886
        %v896 = vmul.f32 %v859, %v886
        %v897 = vmul.f32 %v860, %v886
        %v898 = vmul.f32 %v861, %v886
        %v899 = vmul.f32 %v862, %v886
        %v900 = vmul.f32 %v863, %v886
        %v901 = vmul.f32 %v864, %v886
        %v902 = vmul.f32 %v865, %v886
        %v903 = vmul.f32 %v866, %v886
        %v904 = vmul.f32 %v867, %v886
        %v905 = vmul.f32 %v868, %v886
        %v906 = vmul.f32 %v869, %v886
        %v907 = vmul.f32 %v870, %v886
        %v908 = vmul.f32 %v871, %v886
        %v909 = vmul.f32 %v872, %v886
        %v910 = vmul.f32 %v873, %v886
        %v911 = vmul.f32 %v874, %v886
        %v912 = vmul.f32 %v875, %v886
        %v913 = vmul.f32 %v876, %v886
        %v914 = vmul.f32 %v877, %v886
        %v915 = vmul.f32 %v878, %v886
        %v916 = vmul.f32 %v879, %v886
        %v917 = vmul.f32 %v880, %v886
        %v918 = vmul.f32 %v881, %v886
        %v919 = vadd.f32 %v818, %v887
        %v920 = vadd.f32 %v819, %v888
        %v921 = vadd.f32 %v820, %v889
        %v922 = vadd.f32 %v821, %v890
        %v923 = vadd.f32 %v822, %v891
        %v924 = vadd.f32 %v823, %v892
        %v925 = vadd.f32 %v824, %v893
        %v926 = vadd.f32 %v825, %v894
        %v927 = vadd.f32 %v826, %v895
        %v928 = vadd.f32 %v827, %v896
        %v929 = vadd.f32 %v828, %v897
        %v930 = vadd.f32 %v829, %v898
        %v931 = vadd.f32 %v830, %v899
        %v932 = vadd.f32 %v831, %v900
        %v933 = vadd.f32 %v832, %v901
        %v934 = vadd.f32 %v833, %v902
        %v935 = vadd.f32 %v834, %v903
        %v936 = vadd.f32 %v835, %v904
        %v937 = vadd.f32 %v836, %v905
        %v938 = vadd.f32 %v837, %v906
        %v939 = vadd.f32 %v838, %v907
        %v940 = vadd.f32 %v839, %v908
        %v941 = vadd.f32 %v840, %v909
        %v942 = vadd.f32 %v841, %v910
        %v943 = vadd.f32 %v842, %v911
        %v944 = vadd.f32 %v843, %v912
        %v945 = vadd.f32 %v844, %v913
        %v946 = vadd.f32 %v845, %v914
        %v947 = vadd.f32 %v846, %v915
        %v948 = vadd.f32 %v847, %v916
        %v949 = vadd.f32 %v848, %v917
        %v950 = vadd.f32 %v849, %v918
        %v951 = vld [vmem:[#allocation3] sm:$0xff]
        %v952 = vld [vmem:[#allocation3 + $0x8] sm:$0xff]
        %v953 = vld [vmem:[#allocation3 + $0x10] sm:$0xff]
        %v954 = vld [vmem:[#allocation3 + $0x18] sm:$0xff]
        %v955 = vld [vmem:[#allocation3 + $0x20] sm:$0xff]
        %v956 = vld [vmem:[#allocation3 + $0x28] sm:$0xff]
        %v957 = vld [vmem:[#allocation3 + $0x30] sm:$0xff]
        %v958 = vld [vmem:[#allocation3 + $0x38] sm:$0xff]
        %v959 = vld [vmem:[#allocation3 + $0x40] sm:$0xff]
        %v960 = vld [vmem:[#allocation3 + $0x48] sm:$0xff]
        %v961 = vld [vmem:[#allocation3 + $0x50] sm:$0xff]
        %v962 = vld [vmem:[#allocation3 + $0x58] sm:$0xff]
        %v963 = vld [vmem:[#allocation3 + $0x60] sm:$0xff]
        %v964 = vld [vmem:[#allocation3 + $0x68] sm:$0xff]
        %v965 = vld [vmem:[#allocation3 + $0x70] sm:$0xff]
        %v966 = vld [vmem:[#allocation3 + $0x78] sm:$0xff]
        %v967 = vld [vmem:[#allocation3 + $0x80] sm:$0xff]
        %v968 = vld [vmem:[#allocation3 + $0x88] sm:$0xff]
        %v969 = vld [vmem:[#allocation3 + $0x90] sm:$0xff]
        %v970 = vld [vmem:[#allocation3 + $0x98] sm:$0xff]
        %v971 = vld [vmem:[#allocation3 + $0xa0] sm:$0xff]
        %v972 = vld [vmem:[#allocation3 + $0xa8] sm:$0xff]
        %v973 = vld [vmem:[#allocation3 + $0xb0] sm:$0xff]
        %v974 = vld [vmem:[#allocation3 + $0xb8] sm:$0xff]
        %v975 = vld [vmem:[#allocation3 + $0xc0] sm:$0xff]
        %v976 = vld [vmem:[#allocation3 + $0xc8] sm:$0xff]
        %v977 = vld [vmem:[#allocation3 + $0xd0] sm:$0xff]
        %v978 = vld [vmem:[#allocation3 + $0xd8] sm:$0xff]
        %v979 = vld [vmem:[#allocation3 + $0xe0] sm:$0xff]
        %v980 = vld [vmem:[#allocation3 + $0xe8] sm:$0xff]
        %v981 = vld [vmem:[#allocation3 + $0xf0] sm:$0xff]
        %v982 = vld [vmem:[#allocation3 + $0xf8] sm:$0xff]
        %v983 = vadd.f32 %v951, %v919
        %v984 = vadd.f32 %v952, %v920
        %v985 = vadd.f32 %v953, %v921
        %v986 = vadd.f32 %v954, %v922
        %v987 = vadd.f32 %v955, %v923
        %v988 = vadd.f32 %v956, %v924
        %v989 = vadd.f32 %v957, %v925
        %v990 = vadd.f32 %v958, %v926
        %v991 = vadd.f32 %v959, %v927
        %v992 = vadd.f32 %v960, %v928
        %v993 = vadd.f32 %v961, %v929
        %v994 = vadd.f32 %v962, %v930
        %v995 = vadd.f32 %v963, %v931
        %v996 = vadd.f32 %v964, %v932
        %v997 = vadd.f32 %v965, %v933
        %v998 = vadd.f32 %v966, %v934
        %v999 = vadd.f32 %v967, %v935
        %v1000 = vadd.f32 %v968, %v936
        %v1001 = vadd.f32 %v969, %v937
        %v1002 = vadd.f32 %v970, %v938
        %v1003 = vadd.f32 %v971, %v939
        %v1004 = vadd.f32 %v972, %v940
        %v1005 = vadd.f32 %v973, %v941
        %v1006 = vadd.f32 %v974, %v942
        %v1007 = vadd.f32 %v975, %v943
        %v1008 = vadd.f32 %v976, %v944
        %v1009 = vadd.f32 %v977, %v945
        %v1010 = vadd.f32 %v978, %v946
        %v1011 = vadd.f32 %v979, %v947
        %v1012 = vadd.f32 %v980, %v948
        %v1013 = vadd.f32 %v981, %v949
        %v1014 = vadd.f32 %v982, %v950
        %1015 = vst [vmem:[#allocation3] sm:$0xff] %v983
        %1016 = vst [vmem:[#allocation3 + $0x8] sm:$0xff] %v984
        %1017 = vst [vmem:[#allocation3 + $0x10] sm:$0xff] %v985
        %1018 = vst [vmem:[#allocation3 + $0x18] sm:$0xff] %v986
        %1019 = vst [vmem:[#allocation3 + $0x20] sm:$0xff] %v987
        %1020 = vst [vmem:[#allocation3 + $0x28] sm:$0xff] %v988
        %1021 = vst [vmem:[#allocation3 + $0x30] sm:$0xff] %v989
        %1022 = vst [vmem:[#allocation3 + $0x38] sm:$0xff] %v990
        %1023 = vst [vmem:[#allocation3 + $0x40] sm:$0xff] %v991
        %1024 = vst [vmem:[#allocation3 + $0x48] sm:$0xff] %v992
        %1025 = vst [vmem:[#allocation3 + $0x50] sm:$0xff] %v993
        %1026 = vst [vmem:[#allocation3 + $0x58] sm:$0xff] %v994
        %1027 = vst [vmem:[#allocation3 + $0x60] sm:$0xff] %v995
        %1028 = vst [vmem:[#allocation3 + $0x68] sm:$0xff] %v996
        %1029 = vst [vmem:[#allocation3 + $0x70] sm:$0xff] %v997
        %1030 = vst [vmem:[#allocation3 + $0x78] sm:$0xff] %v998
        %1031 = vst [vmem:[#allocation3 + $0x80] sm:$0xff] %v999
        %1032 = vst [vmem:[#allocation3 + $0x88] sm:$0xff] %v1000
        %1033 = vst [vmem:[#allocation3 + $0x90] sm:$0xff] %v1001
        %1034 = vst [vmem:[#allocation3 + $0x98] sm:$0xff] %v1002
        %1035 = vst [vmem:[#allocation3 + $0xa0] sm:$0xff] %v1003
        %1036 = vst [vmem:[#allocation3 + $0xa8] sm:$0xff] %v1004
        %1037 = vst [vmem:[#allocation3 + $0xb0] sm:$0xff] %v1005
        %1038 = vst [vmem:[#allocation3 + $0xb8] sm:$0xff] %v1006
        %1039 = vst [vmem:[#allocation3 + $0xc0] sm:$0xff] %v1007
        %1040 = vst [vmem:[#allocation3 + $0xc8] sm:$0xff] %v1008
        %1041 = vst [vmem:[#allocation3 + $0xd0] sm:$0xff] %v1009
        %1042 = vst [vmem:[#allocation3 + $0xd8] sm:$0xff] %v1010
        %1043 = vst [vmem:[#allocation3 + $0xe0] sm:$0xff] %v1011
        %1044 = vst [vmem:[#allocation3 + $0xe8] sm:$0xff] %v1012
        %1045 = vst [vmem:[#allocation3 + $0xf0] sm:$0xff] %v1013
        %1046 = vst [vmem:[#allocation3 + $0xf8] sm:$0xff] %v1014
        %s1047 = scalar_lea.vmem [#allocation2], 48
        %v1048 = vld [vmem:[%s1047] sm:$0xff]
        %v1049 = vld [vmem:[%s1047 + $0x8] sm:$0xff]
        %v1050 = vld [vmem:[%s1047 + $0x18] sm:$0xff]
        %v1051 = vld [vmem:[%s1047 + $0x20] sm:$0xff]
        %v1052 = vld [vmem:[%s1047 + $0x30] sm:$0xff]
        %v1053 = vld [vmem:[%s1047 + $0x38] sm:$0xff]
        %v1054 = vld [vmem:[%s1047 + $0x48] sm:$0xff]
        %v1055 = vld [vmem:[%s1047 + $0x50] sm:$0xff]
        %v1056 = vld [vmem:[%s1047 + $0x60] sm:$0xff]
        %v1057 = vld [vmem:[%s1047 + $0x68] sm:$0xff]
        %v1058 = vld [vmem:[%s1047 + $0x78] sm:$0xff]
        %v1059 = vld [vmem:[%s1047 + $0x80] sm:$0xff]
        %v1060 = vld [vmem:[%s1047 + $0x90] sm:$0xff]
        %v1061 = vld [vmem:[%s1047 + $0x98] sm:$0xff]
        %v1062 = vld [vmem:[%s1047 + $0xa8] sm:$0xff]
        %v1063 = vld [vmem:[%s1047 + $0xb0] sm:$0xff]
        %v1064 = vld [vmem:[%s1047 + $0xc0] sm:$0xff]
        %v1065 = vld [vmem:[%s1047 + $0xc8] sm:$0xff]
        %v1066 = vld [vmem:[%s1047 + $0xd8] sm:$0xff]
        %v1067 = vld [vmem:[%s1047 + $0xe0] sm:$0xff]
        %v1068 = vld [vmem:[%s1047 + $0xf0] sm:$0xff]
        %v1069 = vld [vmem:[%s1047 + $0xf8] sm:$0xff]
        %v1070 = vld [vmem:[%s1047 + $0x108] sm:$0xff]
        %v1071 = vld [vmem:[%s1047 + $0x110] sm:$0xff]
        %v1072 = vld [vmem:[%s1047 + $0x120] sm:$0xff]
        %v1073 = vld [vmem:[%s1047 + $0x128] sm:$0xff]
        %v1074 = vld [vmem:[%s1047 + $0x138] sm:$0xff]
        %v1075 = vld [vmem:[%s1047 + $0x140] sm:$0xff]
        %v1076 = vld [vmem:[%s1047 + $0x150] sm:$0xff]
        %v1077 = vld [vmem:[%s1047 + $0x158] sm:$0xff]
        %v1078 = vld [vmem:[%s1047 + $0x168] sm:$0xff]
        %v1079 = vld [vmem:[%s1047 + $0x170] sm:$0xff]
        %v1080 = vld [vmem:[#allocation7 + $0x6] sm:$0x1]
        %v1081 = vlaneseq
        %v1082 = vshrl.u32 %v1081, 7
        %v1083 = vsub.s32 0, %v1082
        %v1084 = vrot.slane %v1080, %v1083
        %v1085 = vmul.f32 %v1048, %v1084
        %v1086 = vmul.f32 %v1049, %v1084
        %v1087 = vmul.f32 %v1050, %v1084
        %v1088 = vmul.f32 %v1051, %v1084
        %v1089 = vmul.f32 %v1052, %v1084
        %v1090 = vmul.f32 %v1053, %v1084
        %v1091 = vmul.f32 %v1054, %v1084
        %v1092 = vmul.f32 %v1055, %v1084
        %v1093 = vmul.f32 %v1056, %v1084
        %v1094 = vmul.f32 %v1057, %v1084
        %v1095 = vmul.f32 %v1058, %v1084
        %v1096 = vmul.f32 %v1059, %v1084
        %v1097 = vmul.f32 %v1060, %v1084
        %v1098 = vmul.f32 %v1061, %v1084
        %v1099 = vmul.f32 %v1062, %v1084
        %v1100 = vmul.f32 %v1063, %v1084
        %v1101 = vmul.f32 %v1064, %v1084
        %v1102 = vmul.f32 %v1065, %v1084
        %v1103 = vmul.f32 %v1066, %v1084
        %v1104 = vmul.f32 %v1067, %v1084
        %v1105 = vmul.f32 %v1068, %v1084
        %v1106 = vmul.f32 %v1069, %v1084
        %v1107 = vmul.f32 %v1070, %v1084
        %v1108 = vmul.f32 %v1071, %v1084
        %v1109 = vmul.f32 %v1072, %v1084
        %v1110 = vmul.f32 %v1073, %v1084
        %v1111 = vmul.f32 %v1074, %v1084
        %v1112 = vmul.f32 %v1075, %v1084
        %v1113 = vmul.f32 %v1076, %v1084
        %v1114 = vmul.f32 %v1077, %v1084
        %v1115 = vmul.f32 %v1078, %v1084
        %v1116 = vmul.f32 %v1079, %v1084
        %v1117 = vld [vmem:[%s1047 + $0x1] sm:$0xff]
        %v1118 = vld [vmem:[%s1047 + $0x9] sm:$0xff]
        %v1119 = vld [vmem:[%s1047 + $0x19] sm:$0xff]
        %v1120 = vld [vmem:[%s1047 + $0x21] sm:$0xff]
        %v1121 = vld [vmem:[%s1047 + $0x31] sm:$0xff]
        %v1122 = vld [vmem:[%s1047 + $0x39] sm:$0xff]
        %v1123 = vld [vmem:[%s1047 + $0x49] sm:$0xff]
        %v1124 = vld [vmem:[%s1047 + $0x51] sm:$0xff]
        %v1125 = vld [vmem:[%s1047 + $0x61] sm:$0xff]
        %v1126 = vld [vmem:[%s1047 + $0x69] sm:$0xff]
        %v1127 = vld [vmem:[%s1047 + $0x79] sm:$0xff]
        %v1128 = vld [vmem:[%s1047 + $0x81] sm:$0xff]
        %v1129 = vld [vmem:[%s1047 + $0x91] sm:$0xff]
        %v1130 = vld [vmem:[%s1047 + $0x99] sm:$0xff]
        %v1131 = vld [vmem:[%s1047 + $0xa9] sm:$0xff]
        %v1132 = vld [vmem:[%s1047 + $0xb1] sm:$0xff]
        %v1133 = vld [vmem:[%s1047 + $0xc1] sm:$0xff]
        %v1134 = vld [vmem:[%s1047 + $0xc9] sm:$0xff]
        %v1135 = vld [vmem:[%s1047 + $0xd9] sm:$0xff]
        %v1136 = vld [vmem:[%s1047 + $0xe1] sm:$0xff]
        %v1137 = vld [vmem:[%s1047 + $0xf1] sm:$0xff]
        %v1138 = vld [vmem:[%s1047 + $0xf9] sm:$0xff]
        %v1139 = vld [vmem:[%s1047 + $0x109] sm:$0xff]
        %v1140 = vld [vmem:[%s1047 + $0x111] sm:$0xff]
        %v1141 = vld [vmem:[%s1047 + $0x121] sm:$0xff]
        %v1142 = vld [vmem:[%s1047 + $0x129] sm:$0xff]
        %v1143 = vld [vmem:[%s1047 + $0x139] sm:$0xff]
        %v1144 = vld [vmem:[%s1047 + $0x141] sm:$0xff]
        %v1145 = vld [vmem:[%s1047 + $0x151] sm:$0xff]
        %v1146 = vld [vmem:[%s1047 + $0x159] sm:$0xff]
        %v1147 = vld [vmem:[%s1047 + $0x169] sm:$0xff]
        %v1148 = vld [vmem:[%s1047 + $0x171] sm:$0xff]
        %v1149 = vld [vmem:[#allocation7 + $0x7] sm:$0x1]
        %v1150 = vlaneseq
        %v1151 = vshrl.u32 %v1150, 7
        %v1152 = vsub.s32 0, %v1151
        %v1153 = vrot.slane %v1149, %v1152
        %v1154 = vmul.f32 %v1117, %v1153
        %v1155 = vmul.f32 %v1118, %v1153
        %v1156 = vmul.f32 %v1119, %v1153
        %v1157 = vmul.f32 %v1120, %v1153
        %v1158 = vmul.f32 %v1121, %v1153
        %v1159 = vmul.f32 %v1122, %v1153
        %v1160 = vmul.f32 %v1123, %v1153
        %v1161 = vmul.f32 %v1124, %v1153
        %v1162 = vmul.f32 %v1125, %v1153
        %v1163 = vmul.f32 %v1126, %v1153
        %v1164 = vmul.f32 %v1127, %v1153
        %v1165 = vmul.f32 %v1128, %v1153
        %v1166 = vmul.f32 %v1129, %v1153
        %v1167 = vmul.f32 %v1130, %v1153
        %v1168 = vmul.f32 %v1131, %v1153
        %v1169 = vmul.f32 %v1132, %v1153
        %v1170 = vmul.f32 %v1133, %v1153
        %v1171 = vmul.f32 %v1134, %v1153
        %v1172 = vmul.f32 %v1135, %v1153
        %v1173 = vmul.f32 %v1136, %v1153
        %v1174 = vmul.f32 %v1137, %v1153
        %v1175 = vmul.f32 %v1138, %v1153
        %v1176 = vmul.f32 %v1139, %v1153
        %v1177 = vmul.f32 %v1140, %v1153
        %v1178 = vmul.f32 %v1141, %v1153
        %v1179 = vmul.f32 %v1142, %v1153
        %v1180 = vmul.f32 %v1143, %v1153
        %v1181 = vmul.f32 %v1144, %v1153
        %v1182 = vmul.f32 %v1145, %v1153
        %v1183 = vmul.f32 %v1146, %v1153
        %v1184 = vmul.f32 %v1147, %v1153
        %v1185 = vmul.f32 %v1148, %v1153
        %v1186 = vadd.f32 %v1085, %v1154
        %v1187 = vadd.f32 %v1086, %v1155
        %v1188 = vadd.f32 %v1087, %v1156
        %v1189 = vadd.f32 %v1088, %v1157
        %v1190 = vadd.f32 %v1089, %v1158
        %v1191 = vadd.f32 %v1090, %v1159
        %v1192 = vadd.f32 %v1091, %v1160
        %v1193 = vadd.f32 %v1092, %v1161
        %v1194 = vadd.f32 %v1093, %v1162
        %v1195 = vadd.f32 %v1094, %v1163
        %v1196 = vadd.f32 %v1095, %v1164
        %v1197 = vadd.f32 %v1096, %v1165
        %v1198 = vadd.f32 %v1097, %v1166
        %v1199 = vadd.f32 %v1098, %v1167
        %v1200 = vadd.f32 %v1099, %v1168
        %v1201 = vadd.f32 %v1100, %v1169
        %v1202 = vadd.f32 %v1101, %v1170
        %v1203 = vadd.f32 %v1102, %v1171
        %v1204 = vadd.f32 %v1103, %v1172
        %v1205 = vadd.f32 %v1104, %v1173
        %v1206 = vadd.f32 %v1105, %v1174
        %v1207 = vadd.f32 %v1106, %v1175
        %v1208 = vadd.f32 %v1107, %v1176
        %v1209 = vadd.f32 %v1108, %v1177
        %v1210 = vadd.f32 %v1109, %v1178
        %v1211 = vadd.f32 %v1110, %v1179
        %v1212 = vadd.f32 %v1111, %v1180
        %v1213 = vadd.f32 %v1112, %v1181
        %v1214 = vadd.f32 %v1113, %v1182
        %v1215 = vadd.f32 %v1114, %v1183
        %v1216 = vadd.f32 %v1115, %v1184
        %v1217 = vadd.f32 %v1116, %v1185
        %v1218 = vld [vmem:[%s1047 + $0x2] sm:$0xff]
        %v1219 = vld [vmem:[%s1047 + $0xa] sm:$0xff]
        %v1220 = vld [vmem:[%s1047 + $0x1a] sm:$0xff]
        %v1221 = vld [vmem:[%s1047 + $0x22] sm:$0xff]
        %v1222 = vld [vmem:[%s1047 + $0x32] sm:$0xff]
        %v1223 = vld [vmem:[%s1047 + $0x3a] sm:$0xff]
        %v1224 = vld [vmem:[%s1047 + $0x4a] sm:$0xff]
        %v1225 = vld [vmem:[%s1047 + $0x52] sm:$0xff]
        %v1226 = vld [vmem:[%s1047 + $0x62] sm:$0xff]
        %v1227 = vld [vmem:[%s1047 + $0x6a] sm:$0xff]
        %v1228 = vld [vmem:[%s1047 + $0x7a] sm:$0xff]
        %v1229 = vld [vmem:[%s1047 + $0x82] sm:$0xff]
        %v1230 = vld [vmem:[%s1047 + $0x92] sm:$0xff]
        %v1231 = vld [vmem:[%s1047 + $0x9a] sm:$0xff]
        %v1232 = vld [vmem:[%s1047 + $0xaa] sm:$0xff]
        %v1233 = vld [vmem:[%s1047 + $0xb2] sm:$0xff]
        %v1234 = vld [vmem:[%s1047 + $0xc2] sm:$0xff]
        %v1235 = vld [vmem:[%s1047 + $0xca] sm:$0xff]
        %v1236 = vld [vmem:[%s1047 + $0xda] sm:$0xff]
        %v1237 = vld [vmem:[%s1047 + $0xe2] sm:$0xff]
        %v1238 = vld [vmem:[%s1047 + $0xf2] sm:$0xff]
        %v1239 = vld [vmem:[%s1047 + $0xfa] sm:$0xff]
        %v1240 = vld [vmem:[%s1047 + $0x10a] sm:$0xff]
        %v1241 = vld [vmem:[%s1047 + $0x112] sm:$0xff]
        %v1242 = vld [vmem:[%s1047 + $0x122] sm:$0xff]
        %v1243 = vld [vmem:[%s1047 + $0x12a] sm:$0xff]
        %v1244 = vld [vmem:[%s1047 + $0x13a] sm:$0xff]
        %v1245 = vld [vmem:[%s1047 + $0x142] sm:$0xff]
        %v1246 = vld [vmem:[%s1047 + $0x152] sm:$0xff]
        %v1247 = vld [vmem:[%s1047 + $0x15a] sm:$0xff]
        %v1248 = vld [vmem:[%s1047 + $0x16a] sm:$0xff]
        %v1249 = vld [vmem:[%s1047 + $0x172] sm:$0xff]
        %v1250 = vld [vmem:[#allocation7 + $0x8] sm:$0x1]
        %v1251 = vlaneseq
        %v1252 = vshrl.u32 %v1251, 7
        %v1253 = vsub.s32 0, %v1252
        %v1254 = vrot.slane %v1250, %v1253
        %v1255 = vmul.f32 %v1218, %v1254
        %v1256 = vmul.f32 %v1219, %v1254
        %v1257 = vmul.f32 %v1220, %v1254
        %v1258 = vmul.f32 %v1221, %v1254
        %v1259 = vmul.f32 %v1222, %v1254
        %v1260 = vmul.f32 %v1223, %v1254
        %v1261 = vmul.f32 %v1224, %v1254
        %v1262 = vmul.f32 %v1225, %v1254
        %v1263 = vmul.f32 %v1226, %v1254
        %v1264 = vmul.f32 %v1227, %v1254
        %v1265 = vmul.f32 %v1228, %v1254
        %v1266 = vmul.f32 %v1229, %v1254
        %v1267 = vmul.f32 %v1230, %v1254
        %v1268 = vmul.f32 %v1231, %v1254
        %v1269 = vmul.f32 %v1232, %v1254
        %v1270 = vmul.f32 %v1233, %v1254
        %v1271 = vmul.f32 %v1234, %v1254
        %v1272 = vmul.f32 %v1235, %v1254
        %v1273 = vmul.f32 %v1236, %v1254
        %v1274 = vmul.f32 %v1237, %v1254
        %v1275 = vmul.f32 %v1238, %v1254
        %v1276 = vmul.f32 %v1239, %v1254
        %v1277 = vmul.f32 %v1240, %v1254
        %v1278 = vmul.f32 %v1241, %v1254
        %v1279 = vmul.f32 %v1242, %v1254
        %v1280 = vmul.f32 %v1243, %v1254
        %v1281 = vmul.f32 %v1244, %v1254
        %v1282 = vmul.f32 %v1245, %v1254
        %v1283 = vmul.f32 %v1246, %v1254
        %v1284 = vmul.f32 %v1247, %v1254
        %v1285 = vmul.f32 %v1248, %v1254
        %v1286 = vmul.f32 %v1249, %v1254
        %v1287 = vadd.f32 %v1186, %v1255
        %v1288 = vadd.f32 %v1187, %v1256
        %v1289 = vadd.f32 %v1188, %v1257
        %v1290 = vadd.f32 %v1189, %v1258
        %v1291 = vadd.f32 %v1190, %v1259
        %v1292 = vadd.f32 %v1191, %v1260
        %v1293 = vadd.f32 %v1192, %v1261
        %v1294 = vadd.f32 %v1193, %v1262
        %v1295 = vadd.f32 %v1194, %v1263
        %v1296 = vadd.f32 %v1195, %v1264
        %v1297 = vadd.f32 %v1196, %v1265
        %v1298 = vadd.f32 %v1197, %v1266
        %v1299 = vadd.f32 %v1198, %v1267
        %v1300 = vadd.f32 %v1199, %v1268
        %v1301 = vadd.f32 %v1200, %v1269
        %v1302 = vadd.f32 %v1201, %v1270
        %v1303 = vadd.f32 %v1202, %v1271
        %v1304 = vadd.f32 %v1203, %v1272
        %v1305 = vadd.f32 %v1204, %v1273
        %v1306 = vadd.f32 %v1205, %v1274
        %v1307 = vadd.f32 %v1206, %v1275
        %v1308 = vadd.f32 %v1207, %v1276
        %v1309 = vadd.f32 %v1208, %v1277
        %v1310 = vadd.f32 %v1209, %v1278
        %v1311 = vadd.f32 %v1210, %v1279
        %v1312 = vadd.f32 %v1211, %v1280
        %v1313 = vadd.f32 %v1212, %v1281
        %v1314 = vadd.f32 %v1213, %v1282
        %v1315 = vadd.f32 %v1214, %v1283
        %v1316 = vadd.f32 %v1215, %v1284
        %v1317 = vadd.f32 %v1216, %v1285
        %v1318 = vadd.f32 %v1217, %v1286
        %v1319 = vld [vmem:[#allocation3] sm:$0xff]
        %v1320 = vld [vmem:[#allocation3 + $0x8] sm:$0xff]
        %v1321 = vld [vmem:[#allocation3 + $0x10] sm:$0xff]
        %v1322 = vld [vmem:[#allocation3 + $0x18] sm:$0xff]
        %v1323 = vld [vmem:[#allocation3 + $0x20] sm:$0xff]
        %v1324 = vld [vmem:[#allocation3 + $0x28] sm:$0xff]
        %v1325 = vld [vmem:[#allocation3 + $0x30] sm:$0xff]
        %v1326 = vld [vmem:[#allocation3 + $0x38] sm:$0xff]
        %v1327 = vld [vmem:[#allocation3 + $0x40] sm:$0xff]
        %v1328 = vld [vmem:[#allocation3 + $0x48] sm:$0xff]
        %v1329 = vld [vmem:[#allocation3 + $0x50] sm:$0xff]
        %v1330 = vld [vmem:[#allocation3 + $0x58] sm:$0xff]
        %v1331 = vld [vmem:[#allocation3 + $0x60] sm:$0xff]
        %v1332 = vld [vmem:[#allocation3 + $0x68] sm:$0xff]
        %v1333 = vld [vmem:[#allocation3 + $0x70] sm:$0xff]
        %v1334 = vld [vmem:[#allocation3 + $0x78] sm:$0xff]
        %v1335 = vld [vmem:[#allocation3 + $0x80] sm:$0xff]
        %v1336 = vld [vmem:[#allocation3 + $0x88] sm:$0xff]
        %v1337 = vld [vmem:[#allocation3 + $0x90] sm:$0xff]
        %v1338 = vld [vmem:[#allocation3 + $0x98] sm:$0xff]
        %v1339 = vld [vmem:[#allocation3 + $0xa0] sm:$0xff]
        %v1340 = vld [vmem:[#allocation3 + $0xa8] sm:$0xff]
        %v1341 = vld [vmem:[#allocation3 + $0xb0] sm:$0xff]
        %v1342 = vld [vmem:[#allocation3 + $0xb8] sm:$0xff]
        %v1343 = vld [vmem:[#allocation3 + $0xc0] sm:$0xff]
        %v1344 = vld [vmem:[#allocation3 + $0xc8] sm:$0xff]
        %v1345 = vld [vmem:[#allocation3 + $0xd0] sm:$0xff]
        %v1346 = vld [vmem:[#allocation3 + $0xd8] sm:$0xff]
        %v1347 = vld [vmem:[#allocation3 + $0xe0] sm:$0xff]
        %v1348 = vld [vmem:[#allocation3 + $0xe8] sm:$0xff]
        %v1349 = vld [vmem:[#allocation3 + $0xf0] sm:$0xff]
        %v1350 = vld [vmem:[#allocation3 + $0xf8] sm:$0xff]
        %v1351 = vadd.f32 %v1319, %v1287
        %v1352 = vadd.f32 %v1320, %v1288
        %v1353 = vadd.f32 %v1321, %v1289
        %v1354 = vadd.f32 %v1322, %v1290
        %v1355 = vadd.f32 %v1323, %v1291
        %v1356 = vadd.f32 %v1324, %v1292
        %v1357 = vadd.f32 %v1325, %v1293
        %v1358 = vadd.f32 %v1326, %v1294
        %v1359 = vadd.f32 %v1327, %v1295
        %v1360 = vadd.f32 %v1328, %v1296
        %v1361 = vadd.f32 %v1329, %v1297
        %v1362 = vadd.f32 %v1330, %v1298
        %v1363 = vadd.f32 %v1331, %v1299
        %v1364 = vadd.f32 %v1332, %v1300
        %v1365 = vadd.f32 %v1333, %v1301
        %v1366 = vadd.f32 %v1334, %v1302
        %v1367 = vadd.f32 %v1335, %v1303
        %v1368 = vadd.f32 %v1336, %v1304
        %v1369 = vadd.f32 %v1337, %v1305
        %v1370 = vadd.f32 %v1338, %v1306
        %v1371 = vadd.f32 %v1339, %v1307
        %v1372 = vadd.f32 %v1340, %v1308
        %v1373 = vadd.f32 %v1341, %v1309
        %v1374 = vadd.f32 %v1342, %v1310
        %v1375 = vadd.f32 %v1343, %v1311
        %v1376 = vadd.f32 %v1344, %v1312
        %v1377 = vadd.f32 %v1345, %v1313
        %v1378 = vadd.f32 %v1346, %v1314
        %v1379 = vadd.f32 %v1347, %v1315
        %v1380 = vadd.f32 %v1348, %v1316
        %v1381 = vadd.f32 %v1349, %v1317
        %v1382 = vadd.f32 %v1350, %v1318
        %1383 = vst [vmem:[#allocation3] sm:$0xff] %v1351
        %1384 = vst [vmem:[#allocation3 + $0x8] sm:$0xff] %v1352
        %1385 = vst [vmem:[#allocation3 + $0x10] sm:$0xff] %v1353
        %1386 = vst [vmem:[#allocation3 + $0x18] sm:$0xff] %v1354
        %1387 = vst [vmem:[#allocation3 + $0x20] sm:$0xff] %v1355
        %1388 = vst [vmem:[#allocation3 + $0x28] sm:$0xff] %v1356
        %1389 = vst [vmem:[#allocation3 + $0x30] sm:$0xff] %v1357
        %1390 = vst [vmem:[#allocation3 + $0x38] sm:$0xff] %v1358
        %1391 = vst [vmem:[#allocation3 + $0x40] sm:$0xff] %v1359
        %1392 = vst [vmem:[#allocation3 + $0x48] sm:$0xff] %v1360
        %1393 = vst [vmem:[#allocation3 + $0x50] sm:$0xff] %v1361
        %1394 = vst [vmem:[#allocation3 + $0x58] sm:$0xff] %v1362
        %1395 = vst [vmem:[#allocation3 + $0x60] sm:$0xff] %v1363
        %1396 = vst [vmem:[#allocation3 + $0x68] sm:$0xff] %v1364
        %1397 = vst [vmem:[#allocation3 + $0x70] sm:$0xff] %v1365
        %1398 = vst [vmem:[#allocation3 + $0x78] sm:$0xff] %v1366
        %1399 = vst [vmem:[#allocation3 + $0x80] sm:$0xff] %v1367
        %1400 = vst [vmem:[#allocation3 + $0x88] sm:$0xff] %v1368
        %1401 = vst [vmem:[#allocation3 + $0x90] sm:$0xff] %v1369
        %1402 = vst [vmem:[#allocation3 + $0x98] sm:$0xff] %v1370
        %1403 = vst [vmem:[#allocation3 + $0xa0] sm:$0xff] %v1371
        %1404 = vst [vmem:[#allocation3 + $0xa8] sm:$0xff] %v1372
        %1405 = vst [vmem:[#allocation3 + $0xb0] sm:$0xff] %v1373
        %1406 = vst [vmem:[#allocation3 + $0xb8] sm:$0xff] %v1374
        %1407 = vst [vmem:[#allocation3 + $0xc0] sm:$0xff] %v1375
        %1408 = vst [vmem:[#allocation3 + $0xc8] sm:$0xff] %v1376
        %1409 = vst [vmem:[#allocation3 + $0xd0] sm:$0xff] %v1377
        %1410 = vst [vmem:[#allocation3 + $0xd8] sm:$0xff] %v1378
        %1411 = vst [vmem:[#allocation3 + $0xe0] sm:$0xff] %v1379
        %1412 = vst [vmem:[#allocation3 + $0xe8] sm:$0xff] %v1380
        %1413 = vst [vmem:[#allocation3 + $0xf0] sm:$0xff] %v1381
        %1414 = vst [vmem:[#allocation3 + $0xf8] sm:$0xff] %v1382
        %v1415 = vld [vmem:[#allocation3] sm:$0xff]
        %v1416 = vld [vmem:[#allocation3 + $0x8] sm:$0xff]
        %v1417 = vld [vmem:[#allocation3 + $0x10] sm:$0xff]
        %v1418 = vld [vmem:[#allocation3 + $0x18] sm:$0xff]
        %v1419 = vld [vmem:[#allocation3 + $0x20] sm:$0xff]
        %v1420 = vld [vmem:[#allocation3 + $0x28] sm:$0xff]
        %v1421 = vld [vmem:[#allocation3 + $0x30] sm:$0xff]
        %v1422 = vld [vmem:[#allocation3 + $0x38] sm:$0xff]
        %v1423 = vld [vmem:[#allocation3 + $0x40] sm:$0xff]
        %v1424 = vld [vmem:[#allocation3 + $0x48] sm:$0xff]
        %v1425 = vld [vmem:[#allocation3 + $0x50] sm:$0xff]
        %v1426 = vld [vmem:[#allocation3 + $0x58] sm:$0xff]
        %v1427 = vld [vmem:[#allocation3 + $0x60] sm:$0xff]
        %v1428 = vld [vmem:[#allocation3 + $0x68] sm:$0xff]
        %v1429 = vld [vmem:[#allocation3 + $0x70] sm:$0xff]
        %v1430 = vld [vmem:[#allocation3 + $0x78] sm:$0xff]
        %v1431 = vld [vmem:[#allocation3 + $0x80] sm:$0xff]
        %v1432 = vld [vmem:[#allocation3 + $0x88] sm:$0xff]
        %v1433 = vld [vmem:[#allocation3 + $0x90] sm:$0xff]
        %v1434 = vld [vmem:[#allocation3 + $0x98] sm:$0xff]
        %v1435 = vld [vmem:[#allocation3 + $0xa0] sm:$0xff]
        %v1436 = vld [vmem:[#allocation3 + $0xa8] sm:$0xff]
        %v1437 = vld [vmem:[#allocation3 + $0xb0] sm:$0xff]
        %v1438 = vld [vmem:[#allocation3 + $0xb8] sm:$0xff]
        %v1439 = vld [vmem:[#allocation3 + $0xc0] sm:$0xff]
        %v1440 = vld [vmem:[#allocation3 + $0xc8] sm:$0xff]
        %v1441 = vld [vmem:[#allocation3 + $0xd0] sm:$0xff]
        %v1442 = vld [vmem:[#allocation3 + $0xd8] sm:$0xff]
        %v1443 = vld [vmem:[#allocation3 + $0xe0] sm:$0xff]
        %v1444 = vld [vmem:[#allocation3 + $0xe8] sm:$0xff]
        %v1445 = vld [vmem:[#allocation3 + $0xf0] sm:$0xff]
        %v1446 = vld [vmem:[#allocation3 + $0xf8] sm:$0xff]
        %v1447 = vld [vmem:[%s2] sm:$0x1]
        %v1449 = vlaneseq
        %v1450 = vshrl.u32 %v1449, 7
        %v1451 = vsub.s32 0, %v1450
        %v1452 = vrot.slane %v1447, %v1451
        %v1454 = vadd.f32 %v1415, %v1452
        %v1455 = vadd.f32 %v1416, %v1452
        %v1456 = vadd.f32 %v1417, %v1452
        %v1457 = vadd.f32 %v1418, %v1452
        %v1458 = vadd.f32 %v1419, %v1452
        %v1459 = vadd.f32 %v1420, %v1452
        %v1460 = vadd.f32 %v1421, %v1452
        %v1461 = vadd.f32 %v1422, %v1452
        %v1462 = vadd.f32 %v1423, %v1452
        %v1463 = vadd.f32 %v1424, %v1452
        %v1464 = vadd.f32 %v1425, %v1452
        %v1465 = vadd.f32 %v1426, %v1452
        %v1466 = vadd.f32 %v1427, %v1452
        %v1467 = vadd.f32 %v1428, %v1452
        %v1468 = vadd.f32 %v1429, %v1452
        %v1469 = vadd.f32 %v1430, %v1452
        %v1470 = vadd.f32 %v1431, %v1452
        %v1471 = vadd.f32 %v1432, %v1452
        %v1472 = vadd.f32 %v1433, %v1452
        %v1473 = vadd.f32 %v1434, %v1452
        %v1474 = vadd.f32 %v1435, %v1452
        %v1475 = vadd.f32 %v1436, %v1452
        %v1476 = vadd.f32 %v1437, %v1452
        %v1477 = vadd.f32 %v1438, %v1452
        %v1478 = vadd.f32 %v1439, %v1452
        %v1479 = vadd.f32 %v1440, %v1452
        %v1480 = vadd.f32 %v1441, %v1452
        %v1481 = vadd.f32 %v1442, %v1452
        %v1482 = vadd.f32 %v1443, %v1452
        %v1483 = vadd.f32 %v1444, %v1452
        %v1484 = vadd.f32 %v1445, %v1452
        %v1485 = vadd.f32 %v1446, %v1452
        %v1486 = vsub.f32 0.0, %v1454
        %v1487 = vsub.f32 0.0, %v1455
        %v1488 = vsub.f32 0.0, %v1456
        %v1489 = vsub.f32 0.0, %v1457
        %v1490 = vsub.f32 0.0, %v1458
        %v1491 = vsub.f32 0.0, %v1459
        %v1492 = vsub.f32 0.0, %v1460
        %v1493 = vsub.f32 0.0, %v1461
        %v1494 = vsub.f32 0.0, %v1462
        %v1495 = vsub.f32 0.0, %v1463
        %v1496 = vsub.f32 0.0, %v1464
        %v1497 = vsub.f32 0.0, %v1465
        %v1498 = vsub.f32 0.0, %v1466
        %v1499 = vsub.f32 0.0, %v1467
        %v1500 = vsub.f32 0.0, %v1468
        %v1501 = vsub.f32 0.0, %v1469
        %v1502 = vsub.f32 0.0, %v1470
        %v1503 = vsub.f32 0.0, %v1471
        %v1504 = vsub.f32 0.0, %v1472
        %v1505 = vsub.f32 0.0, %v1473
        %v1506 = vsub.f32 0.0, %v1474
        %v1507 = vsub.f32 0.0, %v1475
        %v1508 = vsub.f32 0.0, %v1476
        %v1509 = vsub.f32 0.0, %v1477
        %v1510 = vsub.f32 0.0, %v1478
        %v1511 = vsub.f32 0.0, %v1479
        %v1512 = vsub.f32 0.0, %v1480
        %v1513 = vsub.f32 0.0, %v1481
        %v1514 = vsub.f32 0.0, %v1482
        %v1515 = vsub.f32 0.0, %v1483
        %v1516 = vsub.f32 0.0, %v1484
        %v1517 = vsub.f32 0.0, %v1485
        %v1518 = vmul.f32 %v1486, 1.442695
        %v1519 = vpow.pop %v1518
        %v1520 = vmul.f32 %v1487, 1.442695
        %v1521 = vpow.pop %v1520
        %v1522 = vmul.f32 %v1488, 1.442695
        %v1523 = vpow.pop %v1522
        %v1524 = vmul.f32 %v1489, 1.442695
        %v1525 = vpow.pop %v1524
        %v1526 = vmul.f32 %v1490, 1.442695
        %v1527 = vpow.pop %v1526
        %v1528 = vmul.f32 %v1491, 1.442695
        %v1529 = vpow.pop %v1528
        %v1530 = vmul.f32 %v1492, 1.442695
        %v1531 = vpow.pop %v1530
        %v1532 = vmul.f32 %v1493, 1.442695
        %v1533 = vpow.pop %v1532
        %v1534 = vmul.f32 %v1494, 1.442695
        %v1535 = vpow.pop %v1534
        %v1536 = vmul.f32 %v1495, 1.442695
        %v1537 = vpow.pop %v1536
        %v1538 = vmul.f32 %v1496, 1.442695
        %v1539 = vpow.pop %v1538
        %v1540 = vmul.f32 %v1497, 1.442695
        %v1541 = vpow.pop %v1540
        %v1542 = vmul.f32 %v1498, 1.442695
        %v1543 = vpow.pop %v1542
        %v1544 = vmul.f32 %v1499, 1.442695
        %v1545 = vpow.pop %v1544
        %v1546 = vmul.f32 %v1500, 1.442695
        %v1547 = vpow.pop %v1546
        %v1548 = vmul.f32 %v1501, 1.442695
        %v1549 = vpow.pop %v1548
        %v1550 = vmul.f32 %v1502, 1.442695
        %v1551 = vpow.pop %v1550
        %v1552 = vmul.f32 %v1503, 1.442695
        %v1553 = vpow.pop %v1552
        %v1554 = vmul.f32 %v1504, 1.442695
        %v1555 = vpow.pop %v1554
        %v1556 = vmul.f32 %v1505, 1.442695
        %v1557 = vpow.pop %v1556
        %v1558 = vmul.f32 %v1506, 1.442695
        %v1559 = vpow.pop %v1558
        %v1560 = vmul.f32 %v1507, 1.442695
        %v1561 = vpow.pop %v1560
        %v1562 = vmul.f32 %v1508, 1.442695
        %v1563 = vpow.pop %v1562
        %v1564 = vmul.f32 %v1509, 1.442695
        %v1565 = vpow.pop %v1564
        %v1566 = vmul.f32 %v1510, 1.442695
        %v1567 = vpow.pop %v1566
        %v1568 = vmul.f32 %v1511, 1.442695
        %v1569 = vpow.pop %v1568
        %v1570 = vmul.f32 %v1512, 1.442695
        %v1571 = vpow.pop %v1570
        %v1572 = vmul.f32 %v1513, 1.442695
        %v1573 = vpow.pop %v1572
        %v1574 = vmul.f32 %v1514, 1.442695
        %v1575 = vpow.pop %v1574
        %v1576 = vmul.f32 %v1515, 1.442695
        %v1577 = vpow.pop %v1576
        %v1578 = vmul.f32 %v1516, 1.442695
        %v1579 = vpow.pop %v1578
        %v1580 = vmul.f32 %v1517, 1.442695
        %v1581 = vpow.pop %v1580
        %v1582 = vadd.f32 %v1519, 1.0
        %v1583 = vadd.f32 %v1521, 1.0
        %v1584 = vadd.f32 %v1523, 1.0
        %v1585 = vadd.f32 %v1525, 1.0
        %v1586 = vadd.f32 %v1527, 1.0
        %v1587 = vadd.f32 %v1529, 1.0
        %v1588 = vadd.f32 %v1531, 1.0
        %v1589 = vadd.f32 %v1533, 1.0
        %v1590 = vadd.f32 %v1535, 1.0
        %v1591 = vadd.f32 %v1537, 1.0
        %v1592 = vadd.f32 %v1539, 1.0
        %v1593 = vadd.f32 %v1541, 1.0
        %v1594 = vadd.f32 %v1543, 1.0
        %v1595 = vadd.f32 %v1545, 1.0
        %v1596 = vadd.f32 %v1547, 1.0
        %v1597 = vadd.f32 %v1549, 1.0
        %v1598 = vadd.f32 %v1551, 1.0
        %v1599 = vadd.f32 %v1553, 1.0
        %v1600 = vadd.f32 %v1555, 1.0
        %v1601 = vadd.f32 %v1557, 1.0
        %v1602 = vadd.f32 %v1559, 1.0
        %v1603 = vadd.f32 %v1561, 1.0
        %v1604 = vadd.f32 %v1563, 1.0
        %v1605 = vadd.f32 %v1565, 1.0
        %v1606 = vadd.f32 %v1567, 1.0
        %v1607 = vadd.f32 %v1569, 1.0
        %v1608 = vadd.f32 %v1571, 1.0
        %v1609 = vadd.f32 %v1573, 1.0
        %v1610 = vadd.f32 %v1575, 1.0
        %v1611 = vadd.f32 %v1577, 1.0
        %v1612 = vadd.f32 %v1579, 1.0
        %v1613 = vadd.f32 %v1581, 1.0
        %v1614 = vrcp.pop %v1582
        %v1615 = vmul.f32 1.0, %v1614
        %v1616 = vrcp.pop %v1583
        %v1617 = vmul.f32 1.0, %v1616
        %v1618 = vrcp.pop %v1584
        %v1619 = vmul.f32 1.0, %v1618
        %v1620 = vrcp.pop %v1585
        %v1621 = vmul.f32 1.0, %v1620
        %v1622 = vrcp.pop %v1586
        %v1623 = vmul.f32 1.0, %v1622
        %v1624 = vrcp.pop %v1587
        %v1625 = vmul.f32 1.0, %v1624
        %v1626 = vrcp.pop %v1588
        %v1627 = vmul.f32 1.0, %v1626
        %v1628 = vrcp.pop %v1589
        %v1629 = vmul.f32 1.0, %v1628
        %v1630 = vrcp.pop %v1590
        %v1631 = vmul.f32 1.0, %v1630
        %v1632 = vrcp.pop %v1591
        %v1633 = vmul.f32 1.0, %v1632
        %v1634 = vrcp.pop %v1592
        %v1635 = vmul.f32 1.0, %v1634
        %v1636 = vrcp.pop %v1593
        %v1637 = vmul.f32 1.0, %v1636
        %v1638 = vrcp.pop %v1594
        %v1639 = vmul.f32 1.0, %v1638
        %v1640 = vrcp.pop %v1595
        %v1641 = vmul.f32 1.0, %v1640
        %v1642 = vrcp.pop %v1596
        %v1643 = vmul.f32 1.0, %v1642
        %v1644 = vrcp.pop %v1597
        %v1645 = vmul.f32 1.0, %v1644
        %v1646 = vrcp.pop %v1598
        %v1647 = vmul.f32 1.0, %v1646
        %v1648 = vrcp.pop %v1599
        %v1649 = vmul.f32 1.0, %v1648
        %v1650 = vrcp.pop %v1600
        %v1651 = vmul.f32 1.0, %v1650
        %v1652 = vrcp.pop %v1601
        %v1653 = vmul.f32 1.0, %v1652
        %v1654 = vrcp.pop %v1602
        %v1655 = vmul.f32 1.0, %v1654
        %v1656 = vrcp.pop %v1603
        %v1657 = vmul.f32 1.0, %v1656
        %v1658 = vrcp.pop %v1604
        %v1659 = vmul.f32 1.0, %v1658
        %v1660 = vrcp.pop %v1605
        %v1661 = vmul.f32 1.0, %v1660
        %v1662 = vrcp.pop %v1606
        %v1663 = vmul.f32 1.0, %v1662
        %v1664 = vrcp.pop %v1607
        %v1665 = vmul.f32 1.0, %v1664
        %v1666 = vrcp.pop %v1608
        %v1667 = vmul.f32 1.0, %v1666
        %v1668 = vrcp.pop %v1609
        %v1669 = vmul.f32 1.0, %v1668
        %v1670 = vrcp.pop %v1610
        %v1671 = vmul.f32 1.0, %v1670
        %v1672 = vrcp.pop %v1611
        %v1673 = vmul.f32 1.0, %v1672
        %v1674 = vrcp.pop %v1612
        %v1675 = vmul.f32 1.0, %v1674
        %v1676 = vrcp.pop %v1613
        %v1677 = vmul.f32 1.0, %v1676
        %v1678 = vmul.f32 %v1454, %v1615
        %v1679 = vmul.f32 %v1455, %v1617
        %v1680 = vmul.f32 %v1456, %v1619
        %v1681 = vmul.f32 %v1457, %v1621
        %v1682 = vmul.f32 %v1458, %v1623
        %v1683 = vmul.f32 %v1459, %v1625
        %v1684 = vmul.f32 %v1460, %v1627
        %v1685 = vmul.f32 %v1461, %v1629
        %v1686 = vmul.f32 %v1462, %v1631
        %v1687 = vmul.f32 %v1463, %v1633
        %v1688 = vmul.f32 %v1464, %v1635
        %v1689 = vmul.f32 %v1465, %v1637
        %v1690 = vmul.f32 %v1466, %v1639
        %v1691 = vmul.f32 %v1467, %v1641
        %v1692 = vmul.f32 %v1468, %v1643
        %v1693 = vmul.f32 %v1469, %v1645
        %v1694 = vmul.f32 %v1470, %v1647
        %v1695 = vmul.f32 %v1471, %v1649
        %v1696 = vmul.f32 %v1472, %v1651
        %v1697 = vmul.f32 %v1473, %v1653
        %v1698 = vmul.f32 %v1474, %v1655
        %v1699 = vmul.f32 %v1475, %v1657
        %v1700 = vmul.f32 %v1476, %v1659
        %v1701 = vmul.f32 %v1477, %v1661
        %v1702 = vmul.f32 %v1478, %v1663
        %v1703 = vmul.f32 %v1479, %v1665
        %v1704 = vmul.f32 %v1480, %v1667
        %v1705 = vmul.f32 %v1481, %v1669
        %v1706 = vmul.f32 %v1482, %v1671
        %v1707 = vmul.f32 %v1483, %v1673
        %v1708 = vmul.f32 %v1484, %v1675
        %v1709 = vmul.f32 %v1485, %v1677
        %v1710 = vpack.c.bf16 %v1679, %v1678
        %v1711 = vpack.c.bf16 %v1681, %v1680
        %v1712 = vpack.c.bf16 %v1683, %v1682
        %v1713 = vpack.c.bf16 %v1685, %v1684
        %v1714 = vpack.c.bf16 %v1687, %v1686
        %v1715 = vpack.c.bf16 %v1689, %v1688
        %v1716 = vpack.c.bf16 %v1691, %v1690
        %v1717 = vpack.c.bf16 %v1693, %v1692
        %v1718 = vpack.c.bf16 %v1695, %v1694
        %v1719 = vpack.c.bf16 %v1697, %v1696
        %v1720 = vpack.c.bf16 %v1699, %v1698
        %v1721 = vpack.c.bf16 %v1701, %v1700
        %v1722 = vpack.c.bf16 %v1703, %v1702
        %v1723 = vpack.c.bf16 %v1705, %v1704
        %v1724 = vpack.c.bf16 %v1707, %v1706
        %v1725 = vpack.c.bf16 %v1709, %v1708
        %v1726 = vld [vmem:[#allocation9] sm:$0xf]
        %v1727 = vld [vmem:[#allocation9 + $0x4] sm:$0xf]
        %v1728 = vld [vmem:[#allocation9 + $0x8] sm:$0xf]
        %v1729 = vld [vmem:[#allocation9 + $0xc] sm:$0xf]
        %v1730 = vld [vmem:[#allocation9 + $0x10] sm:$0xf]
        %v1731 = vld [vmem:[#allocation9 + $0x14] sm:$0xf]
        %v1732 = vld [vmem:[#allocation9 + $0x18] sm:$0xf]
        %v1733 = vld [vmem:[#allocation9 + $0x1c] sm:$0xf]
        %v1734 = vld [vmem:[#allocation9 + $0x20] sm:$0xf]
        %v1735 = vld [vmem:[#allocation9 + $0x24] sm:$0xf]
        %v1736 = vld [vmem:[#allocation9 + $0x28] sm:$0xf]
        %v1737 = vld [vmem:[#allocation9 + $0x2c] sm:$0xf]
        %v1738 = vld [vmem:[#allocation9 + $0x30] sm:$0xf]
        %v1739 = vld [vmem:[#allocation9 + $0x34] sm:$0xf]
        %v1740 = vld [vmem:[#allocation9 + $0x38] sm:$0xf]
        %v1741 = vld [vmem:[#allocation9 + $0x3c] sm:$0xf]
        %v1742 = vld [vmem:[%s4] sm:$0x1]
        %v1744 = vlaneseq
        %v1745 = vshrl.u32 %v1744, 7
        %v1746 = vsub.s32 0, %v1745
        %v1747 = vrot.slane %v1742, %v1746
        %v1765 = vunpack.c.l.b16 %v1726
        %v1766 = vunpack.c.l.b16 %v1727
        %v1767 = vunpack.c.l.b16 %v1728
        %v1768 = vunpack.c.l.b16 %v1729
        %v1769 = vunpack.c.l.b16 %v1730
        %v1770 = vunpack.c.l.b16 %v1731
        %v1771 = vunpack.c.l.b16 %v1732
        %v1772 = vunpack.c.l.b16 %v1733
        %v1773 = vunpack.c.l.b16 %v1734
        %v1774 = vunpack.c.l.b16 %v1735
        %v1775 = vunpack.c.l.b16 %v1736
        %v1776 = vunpack.c.l.b16 %v1737
        %v1777 = vunpack.c.l.b16 %v1738
        %v1778 = vunpack.c.l.b16 %v1739
        %v1779 = vunpack.c.l.b16 %v1740
        %v1780 = vunpack.c.l.b16 %v1741
        %v1781 = vpack.c.b16 %v1766, %v1765
        %v1782 = vpack.c.b16 %v1768, %v1767
        %v1783 = vpack.c.b16 %v1770, %v1769
        %v1784 = vpack.c.b16 %v1772, %v1771
        %v1785 = vpack.c.b16 %v1774, %v1773
        %v1786 = vpack.c.b16 %v1776, %v1775
        %v1787 = vpack.c.b16 %v1778, %v1777
        %v1788 = vpack.c.b16 %v1780, %v1779
        %1797 = vmatprep.subr.bf16.mxu0 0
        %1798 = vmatpush1.bf16.msra.mxu0 %v1788
        %1799 = vmatprep.subr.bf16.mxu0 0
        %1800 = vmatpush1.bf16.msra.mxu0 %v1787
        %1801 = vmatprep.subr.bf16.mxu0 0
        %1802 = vmatpush1.bf16.msra.mxu0 %v1786
        %1803 = vmatprep.subr.bf16.mxu0 0
        %1804 = vmatpush1.bf16.msra.mxu0 %v1785
        %1805 = vmatprep.subr.bf16.mxu0 0
        %1806 = vmatpush1.bf16.msra.mxu0 %v1784
        %1807 = vmatprep.subr.bf16.mxu0 0
        %1808 = vmatpush1.bf16.msra.mxu0 %v1783
        %1809 = vmatprep.subr.bf16.mxu0 0
        %1810 = vmatpush1.bf16.msra.mxu0 %v1782
        %1811 = vmatprep.subr.bf16.mxu0 0
        %1812 = vmatpush1.bf16.msra.mxu0 %v1781
        %1813 = vmatprep.subr.bf16.mxu0 0
        %1814 = vmatpush2.bf16.msra.mxu0 0
        %1815 = vmatprep.subr.bf16.mxu0 0
        %1816 = vmatpush2.bf16.msra.mxu0 0
        %1817 = vmatprep.subr.bf16.mxu0 0
        %1818 = vmatpush2.bf16.msra.mxu0 0
        %1819 = vmatprep.subr.bf16.mxu0 0
        %1820 = vmatpush2.bf16.msra.mxu0 0
        %1821 = vmatprep.subr.bf16.mxu0 0
        %1822 = vmatpush2.bf16.msra.mxu0 0
        %1823 = vmatprep.subr.bf16.mxu0 0
        %1824 = vmatpush2.bf16.msra.mxu0 0
        %1825 = vmatprep.subr.bf16.mxu0 0
        %1826 = vmatpush2.bf16.msra.mxu0 0
        %1827 = vmatprep.subr.bf16.mxu0 0
        %1828 = vmatpush2.bf16.msra.mxu0 0
        %1829 = vmatprep.mubr.bf16.mxu0 0
        %1830 = vmatmul.mubr.bf16.gmra.mxu0 %v1710
        %v1831 = vpop.f32.mrf.mxu0
        %v1832 = vadd.f32 %v1747, %v1831
        %v1833 = vpop.f32.mrf.mxu0
        %v1834 = vpop.f32.mrf.mxu0
        %v1835 = vadd.f32 %v1747, %v1834
        %v1836 = vpop.f32.mrf.mxu0
        %1837 = vmatprep.mubr.bf16.mxu0 0
        %1838 = vmatmul.mubr.bf16.gmra.mxu0 %v1711
        %v1839 = vpop.f32.mrf.mxu0
        %v1840 = vadd.f32 %v1747, %v1839
        %v1841 = vpop.f32.mrf.mxu0
        %v1842 = vpop.f32.mrf.mxu0
        %v1843 = vadd.f32 %v1747, %v1842
        %v1844 = vpop.f32.mrf.mxu0
        %1845 = vmatprep.mubr.bf16.mxu0 0
        %1846 = vmatmul.mubr.bf16.gmra.mxu0 %v1712
        %v1847 = vpop.f32.mrf.mxu0
        %v1848 = vadd.f32 %v1747, %v1847
        %v1849 = vpop.f32.mrf.mxu0
        %v1850 = vpop.f32.mrf.mxu0
        %v1851 = vadd.f32 %v1747, %v1850
        %v1852 = vpop.f32.mrf.mxu0
        %1853 = vmatprep.mubr.bf16.mxu0 0
        %1854 = vmatmul.mubr.bf16.gmra.mxu0 %v1713
        %v1855 = vpop.f32.mrf.mxu0
        %v1856 = vadd.f32 %v1747, %v1855
        %v1857 = vpop.f32.mrf.mxu0
        %v1858 = vpop.f32.mrf.mxu0
        %v1859 = vadd.f32 %v1747, %v1858
        %v1860 = vpop.f32.mrf.mxu0
        %1861 = vmatprep.mubr.bf16.mxu0 0
        %1862 = vmatmul.mubr.bf16.gmra.mxu0 %v1714
        %v1863 = vpop.f32.mrf.mxu0
        %v1864 = vadd.f32 %v1747, %v1863
        %v1865 = vpop.f32.mrf.mxu0
        %v1866 = vpop.f32.mrf.mxu0
        %v1867 = vadd.f32 %v1747, %v1866
        %v1868 = vpop.f32.mrf.mxu0
        %1869 = vmatprep.mubr.bf16.mxu0 0
        %1870 = vmatmul.mubr.bf16.gmra.mxu0 %v1715
        %v1871 = vpop.f32.mrf.mxu0
        %v1872 = vadd.f32 %v1747, %v1871
        %v1873 = vpop.f32.mrf.mxu0
        %v1874 = vpop.f32.mrf.mxu0
        %v1875 = vadd.f32 %v1747, %v1874
        %v1876 = vpop.f32.mrf.mxu0
        %1877 = vmatprep.mubr.bf16.mxu0 0
        %1878 = vmatmul.mubr.bf16.gmra.mxu0 %v1716
        %v1879 = vpop.f32.mrf.mxu0
        %v1880 = vadd.f32 %v1747, %v1879
        %v1881 = vpop.f32.mrf.mxu0
        %v1882 = vpop.f32.mrf.mxu0
        %v1883 = vadd.f32 %v1747, %v1882
        %v1884 = vpop.f32.mrf.mxu0
        %1885 = vmatprep.mubr.bf16.mxu0 0
        %1886 = vmatmul.mubr.bf16.gmra.mxu0 %v1717
        %v1887 = vpop.f32.mrf.mxu0
        %v1888 = vadd.f32 %v1747, %v1887
        %v1889 = vpop.f32.mrf.mxu0
        %v1890 = vpop.f32.mrf.mxu0
        %v1891 = vadd.f32 %v1747, %v1890
        %v1892 = vpop.f32.mrf.mxu0
        %1893 = vmatprep.mubr.bf16.mxu0 0
        %1894 = vmatmul.mubr.bf16.gmra.mxu0 %v1718
        %v1895 = vpop.f32.mrf.mxu0
        %v1896 = vadd.f32 %v1747, %v1895
        %v1897 = vpop.f32.mrf.mxu0
        %v1898 = vpop.f32.mrf.mxu0
        %v1899 = vadd.f32 %v1747, %v1898
        %v1900 = vpop.f32.mrf.mxu0
        %1901 = vmatprep.mubr.bf16.mxu0 0
        %1902 = vmatmul.mubr.bf16.gmra.mxu0 %v1719
        %v1903 = vpop.f32.mrf.mxu0
        %v1904 = vadd.f32 %v1747, %v1903
        %v1905 = vpop.f32.mrf.mxu0
        %v1906 = vpop.f32.mrf.mxu0
        %v1907 = vadd.f32 %v1747, %v1906
        %v1908 = vpop.f32.mrf.mxu0
        %1909 = vmatprep.mubr.bf16.mxu0 0
        %1910 = vmatmul.mubr.bf16.gmra.mxu0 %v1720
        %v1911 = vpop.f32.mrf.mxu0
        %v1912 = vadd.f32 %v1747, %v1911
        %v1913 = vpop.f32.mrf.mxu0
        %v1914 = vpop.f32.mrf.mxu0
        %v1915 = vadd.f32 %v1747, %v1914
        %v1916 = vpop.f32.mrf.mxu0
        %1917 = vmatprep.mubr.bf16.mxu0 0
        %1918 = vmatmul.mubr.bf16.gmra.mxu0 %v1721
        %v1919 = vpop.f32.mrf.mxu0
        %v1920 = vadd.f32 %v1747, %v1919
        %v1921 = vpop.f32.mrf.mxu0
        %v1922 = vpop.f32.mrf.mxu0
        %v1923 = vadd.f32 %v1747, %v1922
        %v1924 = vpop.f32.mrf.mxu0
        %1925 = vmatprep.mubr.bf16.mxu0 0
        %1926 = vmatmul.mubr.bf16.gmra.mxu0 %v1722
        %v1927 = vpop.f32.mrf.mxu0
        %v1928 = vadd.f32 %v1747, %v1927
        %v1929 = vpop.f32.mrf.mxu0
        %v1930 = vpop.f32.mrf.mxu0
        %v1931 = vadd.f32 %v1747, %v1930
        %v1932 = vpop.f32.mrf.mxu0
        %1933 = vmatprep.mubr.bf16.mxu0 0
        %1934 = vmatmul.mubr.bf16.gmra.mxu0 %v1723
        %v1935 = vpop.f32.mrf.mxu0
        %v1936 = vadd.f32 %v1747, %v1935
        %v1937 = vpop.f32.mrf.mxu0
        %v1938 = vpop.f32.mrf.mxu0
        %v1939 = vadd.f32 %v1747, %v1938
        %v1940 = vpop.f32.mrf.mxu0
        %1941 = vmatprep.mubr.bf16.mxu0 0
        %1942 = vmatmul.mubr.bf16.gmra.mxu0 %v1724
        %v1943 = vpop.f32.mrf.mxu0
        %v1944 = vadd.f32 %v1747, %v1943
        %v1945 = vpop.f32.mrf.mxu0
        %v1946 = vpop.f32.mrf.mxu0
        %v1947 = vadd.f32 %v1747, %v1946
        %v1948 = vpop.f32.mrf.mxu0
        %1949 = vmatprep.mubr.bf16.mxu0 0
        %1950 = vmatmul.mubr.bf16.gmra.mxu0 %v1725
        %v1951 = vpop.f32.mrf.mxu0
        %v1952 = vadd.f32 %v1747, %v1951
        %v1953 = vpop.f32.mrf.mxu0
        %v1954 = vpop.f32.mrf.mxu0
        %v1955 = vadd.f32 %v1747, %v1954
        %v1956 = vpop.f32.mrf.mxu0
        %1957 = vdwg.mxu0
        %v1958 = vsub.f32 0.0, %v1832
        %v1959 = vsub.f32 0.0, %v1835
        %v1960 = vsub.f32 0.0, %v1840
        %v1961 = vsub.f32 0.0, %v1843
        %v1962 = vsub.f32 0.0, %v1848
        %v1963 = vsub.f32 0.0, %v1851
        %v1964 = vsub.f32 0.0, %v1856
        %v1965 = vsub.f32 0.0, %v1859
        %v1966 = vsub.f32 0.0, %v1864
        %v1967 = vsub.f32 0.0, %v1867
        %v1968 = vsub.f32 0.0, %v1872
        %v1969 = vsub.f32 0.0, %v1875
        %v1970 = vsub.f32 0.0, %v1880
        %v1971 = vsub.f32 0.0, %v1883
        %v1972 = vsub.f32 0.0, %v1888
        %v1973 = vsub.f32 0.0, %v1891
        %v1974 = vsub.f32 0.0, %v1896
        %v1975 = vsub.f32 0.0, %v1899
        %v1976 = vsub.f32 0.0, %v1904
        %v1977 = vsub.f32 0.0, %v1907
        %v1978 = vsub.f32 0.0, %v1912
        %v1979 = vsub.f32 0.0, %v1915
        %v1980 = vsub.f32 0.0, %v1920
        %v1981 = vsub.f32 0.0, %v1923
        %v1982 = vsub.f32 0.0, %v1928
        %v1983 = vsub.f32 0.0, %v1931
        %v1984 = vsub.f32 0.0, %v1936
        %v1985 = vsub.f32 0.0, %v1939
        %v1986 = vsub.f32 0.0, %v1944
        %v1987 = vsub.f32 0.0, %v1947
        %v1988 = vsub.f32 0.0, %v1952
        %v1989 = vsub.f32 0.0, %v1955
        %v1990 = vmul.f32 %v1958, 1.442695
        %v1991 = vpow.pop %v1990
        %v1992 = vmul.f32 %v1959, 1.442695
        %v1993 = vpow.pop %v1992
        %v1994 = vmul.f32 %v1960, 1.442695
        %v1995 = vpow.pop %v1994
        %v1996 = vmul.f32 %v1961, 1.442695
        %v1997 = vpow.pop %v1996
        %v1998 = vmul.f32 %v1962, 1.442695
        %v1999 = vpow.pop %v1998
        %v2000 = vmul.f32 %v1963, 1.442695
        %v2001 = vpow.pop %v2000
        %v2002 = vmul.f32 %v1964, 1.442695
        %v2003 = vpow.pop %v2002
        %v2004 = vmul.f32 %v1965, 1.442695
        %v2005 = vpow.pop %v2004
        %v2006 = vmul.f32 %v1966, 1.442695
        %v2007 = vpow.pop %v2006
        %v2008 = vmul.f32 %v1967, 1.442695
        %v2009 = vpow.pop %v2008
        %v2010 = vmul.f32 %v1968, 1.442695
        %v2011 = vpow.pop %v2010
        %v2012 = vmul.f32 %v1969, 1.442695
        %v2013 = vpow.pop %v2012
        %v2014 = vmul.f32 %v1970, 1.442695
        %v2015 = vpow.pop %v2014
        %v2016 = vmul.f32 %v1971, 1.442695
        %v2017 = vpow.pop %v2016
        %v2018 = vmul.f32 %v1972, 1.442695
        %v2019 = vpow.pop %v2018
        %v2020 = vmul.f32 %v1973, 1.442695
        %v2021 = vpow.pop %v2020
        %v2022 = vmul.f32 %v1974, 1.442695
        %v2023 = vpow.pop %v2022
        %v2024 = vmul.f32 %v1975, 1.442695
        %v2025 = vpow.pop %v2024
        %v2026 = vmul.f32 %v1976, 1.442695
        %v2027 = vpow.pop %v2026
        %v2028 = vmul.f32 %v1977, 1.442695
        %v2029 = vpow.pop %v2028
        %v2030 = vmul.f32 %v1978, 1.442695
        %v2031 = vpow.pop %v2030
        %v2032 = vmul.f32 %v1979, 1.442695
        %v2033 = vpow.pop %v2032
        %v2034 = vmul.f32 %v1980, 1.442695
        %v2035 = vpow.pop %v2034
        %v2036 = vmul.f32 %v1981, 1.442695
        %v2037 = vpow.pop %v2036
        %v2038 = vmul.f32 %v1982, 1.442695
        %v2039 = vpow.pop %v2038
        %v2040 = vmul.f32 %v1983, 1.442695
        %v2041 = vpow.pop %v2040
        %v2042 = vmul.f32 %v1984, 1.442695
        %v2043 = vpow.pop %v2042
        %v2044 = vmul.f32 %v1985, 1.442695
        %v2045 = vpow.pop %v2044
        %v2046 = vmul.f32 %v1986, 1.442695
        %v2047 = vpow.pop %v2046
        %v2048 = vmul.f32 %v1987, 1.442695
        %v2049 = vpow.pop %v2048
        %v2050 = vmul.f32 %v1988, 1.442695
        %v2051 = vpow.pop %v2050
        %v2052 = vmul.f32 %v1989, 1.442695
        %v2053 = vpow.pop %v2052
        %v2054 = vadd.f32 %v1991, 1.0
        %v2055 = vadd.f32 %v1993, 1.0
        %v2056 = vadd.f32 %v1995, 1.0
        %v2057 = vadd.f32 %v1997, 1.0
        %v2058 = vadd.f32 %v1999, 1.0
        %v2059 = vadd.f32 %v2001, 1.0
        %v2060 = vadd.f32 %v2003, 1.0
        %v2061 = vadd.f32 %v2005, 1.0
        %v2062 = vadd.f32 %v2007, 1.0
        %v2063 = vadd.f32 %v2009, 1.0
        %v2064 = vadd.f32 %v2011, 1.0
        %v2065 = vadd.f32 %v2013, 1.0
        %v2066 = vadd.f32 %v2015, 1.0
        %v2067 = vadd.f32 %v2017, 1.0
        %v2068 = vadd.f32 %v2019, 1.0
        %v2069 = vadd.f32 %v2021, 1.0
        %v2070 = vadd.f32 %v2023, 1.0
        %v2071 = vadd.f32 %v2025, 1.0
        %v2072 = vadd.f32 %v2027, 1.0
        %v2073 = vadd.f32 %v2029, 1.0
        %v2074 = vadd.f32 %v2031, 1.0
        %v2075 = vadd.f32 %v2033, 1.0
        %v2076 = vadd.f32 %v2035, 1.0
        %v2077 = vadd.f32 %v2037, 1.0
        %v2078 = vadd.f32 %v2039, 1.0
        %v2079 = vadd.f32 %v2041, 1.0
        %v2080 = vadd.f32 %v2043, 1.0
        %v2081 = vadd.f32 %v2045, 1.0
        %v2082 = vadd.f32 %v2047, 1.0
        %v2083 = vadd.f32 %v2049, 1.0
        %v2084 = vadd.f32 %v2051, 1.0
        %v2085 = vadd.f32 %v2053, 1.0
        %v2086 = vrcp.pop %v2054
        %v2087 = vmul.f32 1.0, %v2086
        %v2088 = vrcp.pop %v2055
        %v2089 = vmul.f32 1.0, %v2088
        %v2090 = vrcp.pop %v2056
        %v2091 = vmul.f32 1.0, %v2090
        %v2092 = vrcp.pop %v2057
        %v2093 = vmul.f32 1.0, %v2092
        %v2094 = vrcp.pop %v2058
        %v2095 = vmul.f32 1.0, %v2094
        %v2096 = vrcp.pop %v2059
        %v2097 = vmul.f32 1.0, %v2096
        %v2098 = vrcp.pop %v2060
        %v2099 = vmul.f32 1.0, %v2098
        %v2100 = vrcp.pop %v2061
        %v2101 = vmul.f32 1.0, %v2100
        %v2102 = vrcp.pop %v2062
        %v2103 = vmul.f32 1.0, %v2102
        %v2104 = vrcp.pop %v2063
        %v2105 = vmul.f32 1.0, %v2104
        %v2106 = vrcp.pop %v2064
        %v2107 = vmul.f32 1.0, %v2106
        %v2108 = vrcp.pop %v2065
        %v2109 = vmul.f32 1.0, %v2108
        %v2110 = vrcp.pop %v2066
        %v2111 = vmul.f32 1.0, %v2110
        %v2112 = vrcp.pop %v2067
        %v2113 = vmul.f32 1.0, %v2112
        %v2114 = vrcp.pop %v2068
        %v2115 = vmul.f32 1.0, %v2114
        %v2116 = vrcp.pop %v2069
        %v2117 = vmul.f32 1.0, %v2116
        %v2118 = vrcp.pop %v2070
        %v2119 = vmul.f32 1.0, %v2118
        %v2120 = vrcp.pop %v2071
        %v2121 = vmul.f32 1.0, %v2120
        %v2122 = vrcp.pop %v2072
        %v2123 = vmul.f32 1.0, %v2122
        %v2124 = vrcp.pop %v2073
        %v2125 = vmul.f32 1.0, %v2124
        %v2126 = vrcp.pop %v2074
        %v2127 = vmul.f32 1.0, %v2126
        %v2128 = vrcp.pop %v2075
        %v2129 = vmul.f32 1.0, %v2128
        %v2130 = vrcp.pop %v2076
        %v2131 = vmul.f32 1.0, %v2130
        %v2132 = vrcp.pop %v2077
        %v2133 = vmul.f32 1.0, %v2132
        %v2134 = vrcp.pop %v2078
        %v2135 = vmul.f32 1.0, %v2134
        %v2136 = vrcp.pop %v2079
        %v2137 = vmul.f32 1.0, %v2136
        %v2138 = vrcp.pop %v2080
        %v2139 = vmul.f32 1.0, %v2138
        %v2140 = vrcp.pop %v2081
        %v2141 = vmul.f32 1.0, %v2140
        %v2142 = vrcp.pop %v2082
        %v2143 = vmul.f32 1.0, %v2142
        %v2144 = vrcp.pop %v2083
        %v2145 = vmul.f32 1.0, %v2144
        %v2146 = vrcp.pop %v2084
        %v2147 = vmul.f32 1.0, %v2146
        %v2148 = vrcp.pop %v2085
        %v2149 = vmul.f32 1.0, %v2148
        %v2150 = vmul.f32 %v1832, %v2087
        %v2151 = vmul.f32 %v1835, %v2089
        %v2152 = vmul.f32 %v1840, %v2091
        %v2153 = vmul.f32 %v1843, %v2093
        %v2154 = vmul.f32 %v1848, %v2095
        %v2155 = vmul.f32 %v1851, %v2097
        %v2156 = vmul.f32 %v1856, %v2099
        %v2157 = vmul.f32 %v1859, %v2101
        %v2158 = vmul.f32 %v1864, %v2103
        %v2159 = vmul.f32 %v1867, %v2105
        %v2160 = vmul.f32 %v1872, %v2107
        %v2161 = vmul.f32 %v1875, %v2109
        %v2162 = vmul.f32 %v1880, %v2111
        %v2163 = vmul.f32 %v1883, %v2113
        %v2164 = vmul.f32 %v1888, %v2115
        %v2165 = vmul.f32 %v1891, %v2117
        %v2166 = vmul.f32 %v1896, %v2119
        %v2167 = vmul.f32 %v1899, %v2121
        %v2168 = vmul.f32 %v1904, %v2123
        %v2169 = vmul.f32 %v1907, %v2125
        %v2170 = vmul.f32 %v1912, %v2127
        %v2171 = vmul.f32 %v1915, %v2129
        %v2172 = vmul.f32 %v1920, %v2131
        %v2173 = vmul.f32 %v1923, %v2133
        %v2174 = vmul.f32 %v1928, %v2135
        %v2175 = vmul.f32 %v1931, %v2137
        %v2176 = vmul.f32 %v1936, %v2139
        %v2177 = vmul.f32 %v1939, %v2141
        %v2178 = vmul.f32 %v1944, %v2143
        %v2179 = vmul.f32 %v1947, %v2145
        %v2180 = vmul.f32 %v1952, %v2147
        %v2181 = vmul.f32 %v1955, %v2149
        %2182 = vst [vmem:[%s271] sm:$0xff] %v2150
        %2183 = vst [vmem:[%s271 + $0x8] sm:$0xff] %v2151
        %2184 = vst [vmem:[%s271 + $0x10] sm:$0xff] %v2152
        %2185 = vst [vmem:[%s271 + $0x18] sm:$0xff] %v2153
        %2186 = vst [vmem:[%s271 + $0x20] sm:$0xff] %v2154
        %2187 = vst [vmem:[%s271 + $0x28] sm:$0xff] %v2155
        %2188 = vst [vmem:[%s271 + $0x30] sm:$0xff] %v2156
        %2189 = vst [vmem:[%s271 + $0x38] sm:$0xff] %v2157
        %2190 = vst [vmem:[%s271 + $0x40] sm:$0xff] %v2158
        %2191 = vst [vmem:[%s271 + $0x48] sm:$0xff] %v2159
        %2192 = vst [vmem:[%s271 + $0x50] sm:$0xff] %v2160
        %2193 = vst [vmem:[%s271 + $0x58] sm:$0xff] %v2161
        %2194 = vst [vmem:[%s271 + $0x60] sm:$0xff] %v2162
        %2195 = vst [vmem:[%s271 + $0x68] sm:$0xff] %v2163
        %2196 = vst [vmem:[%s271 + $0x70] sm:$0xff] %v2164
        %2197 = vst [vmem:[%s271 + $0x78] sm:$0xff] %v2165
        %2198 = vst [vmem:[%s271 + $0x80] sm:$0xff] %v2166
        %2199 = vst [vmem:[%s271 + $0x88] sm:$0xff] %v2167
        %2200 = vst [vmem:[%s271 + $0x90] sm:$0xff] %v2168
        %2201 = vst [vmem:[%s271 + $0x98] sm:$0xff] %v2169
        %2202 = vst [vmem:[%s271 + $0xa0] sm:$0xff] %v2170
        %2203 = vst [vmem:[%s271 + $0xa8] sm:$0xff] %v2171
        %2204 = vst [vmem:[%s271 + $0xb0] sm:$0xff] %v2172
        %2205 = vst [vmem:[%s271 + $0xb8] sm:$0xff] %v2173
        %2206 = vst [vmem:[%s271 + $0xc0] sm:$0xff] %v2174
        %2207 = vst [vmem:[%s271 + $0xc8] sm:$0xff] %v2175
        %2208 = vst [vmem:[%s271 + $0xd0] sm:$0xff] %v2176
        %2209 = vst [vmem:[%s271 + $0xd8] sm:$0xff] %v2177
        %2210 = vst [vmem:[%s271 + $0xe0] sm:$0xff] %v2178
        %2211 = vst [vmem:[%s271 + $0xe8] sm:$0xff] %v2179
        %2212 = vst [vmem:[%s271 + $0xf0] sm:$0xff] %v2180
        %2213 = vst [vmem:[%s271 + $0xf8] sm:$0xff] %v2181
        %s2214 = sand.u32 %s141, 1
        %s2215 = scalar_lea.sflag [#allocation6], %s2214
        %s2216 = sand.u32 %s141, 1
        %s2217 = smul.addr %s2216, 256
        %s2218 = scalar_lea.vmem [#allocation10], %s2217
        // Predicated region
        $region53: #{tpu_custom_call.1} parent=39 // pred_check
          %p2219 = pneg %p151
        $region54: #{tpu_custom_call.1} parent=39 // pred_check_branch
          %2221 = sbr.rel (%p2219) target = $region56
        $region55: #{tpu_custom_call.1} parent=39 // pred_region
          %s2223 = ssub.s32 4096, 4096
          %2224 = vsyncadd %s2215, %s2223
          %s2225 = smul.addr %s23, 32
          %s2226 = smul.addr %s2225, 128
          %s2227 = scalar_lea.hbm %s5, %s2226
          %s2228 = sshll.u32 %s2218, 4
          %s2229 = int_to_ptr.vmem [resolvable:$true] %s2228
          %2234 = dma.vmem_to_hbm [thread:$0]  %s2229, 4096, %s2227, %s2215, 128, 128, 8
        $region56: #{tpu_custom_call.1} parent=39 // pred_fallthru
          _
      $region40: #{tpu_custom_call.1} parent=5 // pred_fallthru
        _
      %p2235 = scmp.le.s32.totalorder 2, %s18
      // Predicated region
      $region57: #{tpu_custom_call.1} parent=5 // pred_check
        %p2236 = pneg %p2235
      $region58: #{tpu_custom_call.1} parent=5 // pred_check_branch
        %2238 = sbr.rel (%p2236) target = $region60
      $region59: #{tpu_custom_call.1} parent=5 // pred_region
        %s2239 = ssub.s32 %s18, 2
        // Predicated region
        $region61: #{tpu_custom_call.1} parent=59 // pred_check
          %p2240 = pneg %p157
        $region62: #{tpu_custom_call.1} parent=59 // pred_check_branch
          %2242 = sbr.rel (%p2240) target = $region64
        $region63: #{tpu_custom_call.1} parent=59 // pred_region
          %s2243 = sand.u32 %s142, 1
          %s2244 = scalar_lea.sflag [#allocation6], %s2243
          %s2245 = sand.u32 %s142, 1
          %s2246 = smul.addr %s2245, 256
          %s2247 = scalar_lea.vmem [#allocation10], %s2246
          %2248 = dma.done %s2244, 4096
        $region64: #{tpu_custom_call.1} parent=59 // pred_fallthru
          _
      $region60: #{tpu_custom_call.1} parent=5 // pred_fallthru
        _
    $region6: #{tpu_custom_call.1} parent=1 // loop_footer
      %s22 = sadd.s32 1, %s18
    $region7: #{tpu_custom_call.1} parent=1 // loop_footer_branch
      %17 = sbr.rel target = $region3
    $region8: #{tpu_custom_call.1} parent=1 // loop_exit
      _
    %2249 = vsyncpa [#allocation5], 1
    %s2250 = scalar_lea.sflag [#allocation5], 1
    %2251 = vsyncpa %s2250, 1
    %2252 = vsyncpa [#allocation8], 1
    %2253 = vsyncpa [#allocation6], 1
    %s2254 = scalar_lea.sflag [#allocation6], 1
    %2255 = vsyncpa %s2254, 1

</llo_original>
